<compile_context>
chip_gen: v7x
topology: tpu7x:2x2x1
jax: 0.10.0
libtpu: 0.0.40
codegen_flags: <defaults>
</compile_context>

<pallas_src>
import numpy as np

import jax
import jax.numpy as jnp
from jax.experimental import pallas as pl
from jax.experimental.pallas import tpu as pltpu

LRELU_SLOPE = 0.2
BN_EPS = 1e-5
N_CONV_LAYERS = 4
CONV_K = 4
CONV_STRIDE = 2
CONV_PAD = 1


# ------------------------------ Pallas kernel ------------------------------ #

def _make_encoder_kernel(geom, k_fc, z_dim, batch):
    """Builds the single fused encoder kernel.

    geom: tuple of (H, W, Cin, OH, OW, Cout) python ints per conv layer.

    Kernel inputs (all whole-array VMEM blocks):
      x2                     (B*H0, W0*3)       flattened NHWC input
      V_1..V_4               (4, W*Cin, OW*Cout) kw taps + W padding + weights
      gb                     (8, Cmax)           gamma/beta of all 4 layers
      P                      (4, OWC, Cmax)      per-channel pooling matrices
      Wfc                    (k_fc, k_fc*C4, 2z) fc weight (mu|log_var merged)
      bfc                    (1, 2z)             fc bias
      eps                    (B, z)              reparametrization noise
    Output: (B, 3z) = [z | mu | log_var].
    Scratch: one zero-padded staging buffer reused by every layer.
    """

    def kernel(x2_ref, v1_ref, v2_ref, v3_ref, v4_ref,
               gb_ref, p_ref, wfc_ref, bfc_ref, eps_ref,
               out_ref, pad_ref):
        v_refs = (v1_ref, v2_ref, v3_ref, v4_ref)
        y = x2_ref[...]                                      # (B*H0, W0*Cin0)

        for l, (H, W, Cin, OH, OW, Cout) in enumerate(geom):
            HP = H + 2 * CONV_PAD
            wc = W * Cin
            owc = OW * Cout

            # --- stage the layer input into a zero-padded scratch (H padding).
            pad_ref[...] = jnp.zeros_like(pad_ref)
            for b in range(batch):
                pad_ref[b * HP + CONV_PAD: b * HP + CONV_PAD + H, 0:wc] = \
                    y[b * H:(b + 1) * H, :]

            # --- conv (k=4, stride 2, pad 1): one stride-2 row slice + one MXU
            #     matmul per kh tap (kw taps / W padding folded into V).
            acc = None
            for kh in range(CONV_K):
                slabs = [
                    pad_ref[pl.ds(b * HP + kh, OH, stride=CONV_STRIDE), 0:wc]
                    for b in range(batch)
                ]
                slab = slabs[0] if batch == 1 else jnp.concatenate(slabs, axis=0)
                term = jnp.dot(slab, v_refs[l][kh],
                               preferred_element_type=jnp.float32)
                acc = term if acc is None else acc + term
            # acc: (B*OH, OW*Cout)

            # --- training-mode BatchNorm; stats pooled per channel with ONE
            #     stacked 2-row matmul  [sum; sum_sq] @ P.
            n = batch * OH * OW
            s1 = jnp.sum(acc, axis=0, keepdims=True)         # (1, OW*Cout)
            s2 = jnp.sum(acc * acc, axis=0, keepdims=True)
            stats = jnp.dot(jnp.concatenate([s1, s2], axis=0),
                            p_ref[l][0:owc, 0:Cout],
                            preferred_element_type=jnp.float32) * (1.0 / n)
            mean = stats[0:1, :]                              # (1, Cout)
            var = stats[1:2, :] - mean * mean                 # biased variance
            gamma = gb_ref[2 * l:2 * l + 1, 0:Cout]
            beta = gb_ref[2 * l + 1:2 * l + 2, 0:Cout]
            scale = gamma * jax.lax.rsqrt(var + BN_EPS)
            shift = beta - mean * scale
            # Columns are ow-major / c-minor -> per-channel vectors broadcast
            # by lane tiling (replaces the scale@PT / shift@PT matmuls).
            scale_cols = scale if OW == 1 else jnp.concatenate([scale] * OW, axis=1)
            shift_cols = shift if OW == 1 else jnp.concatenate([shift] * OW, axis=1)
            ybn = acc * scale_cols + shift_cols

            # --- LeakyReLU(0.2) as a single max after the mul.
            y = jnp.maximum(ybn, LRELU_SLOPE * ybn)

        # --- fc head (k_fc x k_fc VALID conv to 1x1), merged mu|log_var weight.
        if k_fc == 1:
            # The row gather is the identity -> a single matmul.
            h = jnp.dot(y, wfc_ref[0], preferred_element_type=jnp.float32) \
                + bfc_ref[...]
        else:
            cols = y.shape[1]
            pad_ref[...] = jnp.zeros_like(pad_ref)
            pad_ref[0:batch * k_fc, 0:cols] = y
            h = None
            for r in range(k_fc):
                rows = pad_ref[pl.ds(r, batch, stride=k_fc), 0:cols]
                t = jnp.dot(rows, wfc_ref[r], preferred_element_type=jnp.float32)
                h = t if h is None else h + t
            h = h + bfc_ref[...]

        mu = h[:, 0:z_dim]
        log_var = h[:, z_dim:2 * z_dim]
        # reparametrize: z = mu + eps * exp(log_var / 2)   (exp on the EUP)
        z = mu + eps_ref[...] * jnp.exp(log_var * 0.5)
        out_ref[...] = jnp.concatenate([z, mu, log_var], axis=1)

    return kernel


def _vmem_spec():
    return pl.BlockSpec(memory_space=pltpu.MemorySpace.VMEM)


# ----------------------- static gather / pooling plan ---------------------- #

def _col_gather(k, stride, pad, W, OW):
    """G[kw, w, ow] = 1  iff  w == stride*ow + kw - pad (zero elsewhere = pad)."""
    G = np.zeros((k, W, OW), np.float32)
    for kw in range(k):
        for ow in range(OW):
            w = stride * ow + kw - pad
            if 0 <= w < W:
                G[kw, w, ow] = 1.0
    return G


def _channel_pool(OW, C):
    """P[ow*C + c, c] = 1 — pools the (ow, c) column layout down to channels."""
    P = np.zeros((OW * C, C), np.float32)
    for ow in range(OW):
        P[ow * C:(ow + 1) * C, :] = np.eye(C, dtype=np.float32)
    return P


# ------------------------------ parameters ---------------------------------- #

def init_encoder_params(key, image_size=16, z_dim=8, conv_dim=8):
    """Synthetic parameters matching the PyTorch module's shapes.

    Conv weights are stored HWIO (k, k, c_in, c_out).  The Conv2d bias before
    BatchNorm is omitted: it is cancelled exactly by the BN mean subtraction.
    """
    specs = [("conv1", 3, conv_dim),
             ("conv2", conv_dim, conv_dim * 2),
             ("conv3", conv_dim * 2, conv_dim * 4),
             ("conv4", conv_dim * 4, conv_dim * 8)]
    params = {}
    keys = jax.random.split(key, len(specs) + 1)
    for (name, cin, cout), wk in zip(specs, keys[:-1]):
        w = 0.05 * jax.random.normal(wk, (4, 4, cin, cout), jnp.float32)
        gamma = jnp.ones((1, cout), jnp.float32)   # BatchNorm2d weight init
        beta = jnp.zeros((1, cout), jnp.float32)   # BatchNorm2d bias init
        params[name] = (w, gamma, beta)
    k_fc = image_size // 16
    cin_fc, cout_fc = conv_dim * 8, z_dim * 2
    wf = 0.05 * jax.random.normal(keys[-1], (k_fc, k_fc, cin_fc, cout_fc), jnp.float32)
    bf = jnp.zeros((1, cout_fc), jnp.float32)
    params["fc"] = (wf, bf)
    return params


# ------------------------------ forward pass -------------------------------- #

@jax.jit
def encoder_forward(params, x_nchw, eps):
    """Forward pass: (z, mu, log_var).  x_nchw: (B, 3, H, W) float32."""
    B, cin0, H0, W0 = x_nchw.shape
    conv_names = ("conv1", "conv2", "conv3", "conv4")

    # --- static geometry of the 4 stride-2 convs (all python ints).
    geom = []
    H = H0
    for name in conv_names:
        w, _, _ = params[name]
        k, _, cin, cout = w.shape
        OH = (H + 2 * CONV_PAD - k) // CONV_STRIDE + 1
        geom.append((H, H, cin, OH, OH, cout))
        H = OH
    k_fc = H                                   # == image_size // 16
    wf, bf = params["fc"]
    _, _, c4, dout = wf.shape
    z_dim = dout // 2

    cmax = max(g[5] for g in geom)
    owc_max = max(g[4] * g[5] for g in geom)

    # --- kernel inputs.  Flattened-NHWC layout: rows = (b, h), cols = (w, c).
    x2 = jnp.transpose(x_nchw, (0, 2, 3, 1)).reshape(B * H0, W0 * cin0)

    v_list = []
    gb_rows = []
    p_all = np.zeros((N_CONV_LAYERS, owc_max, cmax), np.float32)
    for l, name in enumerate(conv_names):
        w, gamma, beta = params[name]
        Hl, Wl, cin, OHl, OWl, cout = geom[l]
        G = _col_gather(CONV_K, CONV_STRIDE, CONV_PAD, Wl, OWl)   # (k, W, OW)
        # Fold the kw taps (+ W zero padding) and the weights into one matrix
        # per kh: V[kh][(w,c),(ow,co)] = sum_kw G[kw,w,ow] * w[kh,kw,c,co]
        V = jnp.einsum("xwo,hxcd->hwcod", jnp.asarray(G), w)
        v_list.append(V.reshape(CONV_K, Wl * cin, OWl * cout))
        p_all[l, :OWl * cout, :cout] = _channel_pool(OWl, cout)
        gb_rows.append(jnp.pad(gamma, ((0, 0), (0, cmax - cout))))
        gb_rows.append(jnp.pad(beta, ((0, 0), (0, cmax - cout))))
    gb = jnp.concatenate(gb_rows, axis=0)                          # (8, Cmax)
    wfc = wf.reshape(k_fc, k_fc * c4, dout)                        # mu|log_var merged

    kernel_inputs = [x2] + v_list + [gb, jnp.asarray(p_all), wfc, bf, eps]

    # --- scratch: zero-padded staging buffer reused by every layer.
    rows = max(B * (g[0] + 2 * CONV_PAD) for g in geom)
    cols = max(g[1] * g[2] for g in geom)
    if k_fc > 1:
        rows = max(rows, B * k_fc)
        cols = max(cols, k_fc * c4)
    rows = ((rows + 7) // 8) * 8
    cols = ((cols + 127) // 128) * 128

    out = pl.pallas_call(
        _make_encoder_kernel(tuple(geom), k_fc, z_dim, B),
        out_shape=jax.ShapeDtypeStruct((B, 3 * z_dim), jnp.float32),
        in_specs=[_vmem_spec()] * len(kernel_inputs),
        out_specs=_vmem_spec(),
        scratch_shapes=[pltpu.VMEM((rows, cols), jnp.float32)],
    )(*kernel_inputs)

    z = out[:, :z_dim]
    mu = out[:, z_dim:2 * z_dim]
    log_var = out[:, 2 * z_dim:]
    return z, mu, log_var


# ------------------------- pure-JAX reference model ------------------------- #

@jax.jit
def reference_forward(params, x_nchw, eps):
    x = jnp.transpose(x_nchw, (0, 2, 3, 1))
    for name in ("conv1", "conv2", "conv3", "conv4"):
        w, gamma, beta = params[name]
        y = jax.lax.conv_general_dilated(
            x, w, window_strides=(2, 2), padding=((1, 1), (1, 1)),
            dimension_numbers=("NHWC", "HWIO", "NHWC"),
            precision=jax.lax.Precision.HIGHEST)
        mean = jnp.mean(y, axis=(0, 1, 2), keepdims=True)
        var = jnp.mean(jnp.square(y - mean), axis=(0, 1, 2), keepdims=True)
        y = gamma.reshape(1, 1, 1, -1) * (y - mean) * jax.lax.rsqrt(var + BN_EPS) \
            + beta.reshape(1, 1, 1, -1)
        x = jnp.where(y >= 0, y, LRELU_SLOPE * y)
    wf, bf = params["fc"]
    h = jax.lax.conv_general_dilated(
        x, wf, window_strides=(1, 1), padding="VALID",
        dimension_numbers=("NHWC", "HWIO", "NHWC"),
        precision=jax.lax.Precision.HIGHEST)
    h = h.reshape(x.shape[0], -1) + bf
    z_dim = h.shape[1] // 2
    mu, lv = h[:, :z_dim], h[:, z_dim:]
    z = mu + eps * jnp.exp(lv * 0.5)
    return z, mu, lv


# ---------------------------------- main ------------------------------------ #

if __name__ == "__main__":
    IMAGE_SIZE, Z_DIM, CONV_DIM, BATCH = 16, 8, 8, 2

    root = jax.random.PRNGKey(0)
    k_param, k_x, k_eps = jax.random.split(root, 3)

    params = init_encoder_params(k_param, IMAGE_SIZE, Z_DIM, CONV_DIM)
    x = jax.random.normal(k_x, (BATCH, 3, IMAGE_SIZE, IMAGE_SIZE), jnp.float32)
    # eps plays the role of Variable(torch.randn(B, z_dim)) in reparametrize.
    eps = jax.random.normal(k_eps, (BATCH, Z_DIM), jnp.float32)

    z, mu, log_var = encoder_forward(params, x, eps)
    jax.block_until_ready((z, mu, log_var))

    # Correctness check against a pure-JAX reference of the PyTorch forward.
    z_r, mu_r, lv_r = reference_forward(params, x, eps)
    np.testing.assert_allclose(np.asarray(z), np.asarray(z_r), rtol=2e-3, atol=2e-3)
    np.testing.assert_allclose(np.asarray(mu), np.asarray(mu_r), rtol=2e-3, atol=2e-3)
    np.testing.assert_allclose(np.asarray(log_var), np.asarray(lv_r), rtol=2e-3, atol=2e-3)

    assert z.shape == (BATCH, Z_DIM)
    assert mu.shape == (BATCH, Z_DIM)
    assert log_var.shape == (BATCH, Z_DIM)
    print("KERNEL_OK")
</pallas_src>

<mosaic_0001>
module attributes {stable_mosaic.version = 11 : i64} {
  func.func @kernel(%arg0: memref<32x48xf32, #tpu.memory_space<vmem>>, %arg1: memref<4x48x64xf32, #tpu.memory_space<vmem>>, %arg2: memref<4x64x64xf32, #tpu.memory_space<vmem>>, %arg3: memref<4x64x64xf32, #tpu.memory_space<vmem>>, %arg4: memref<4x64x64xf32, #tpu.memory_space<vmem>>, %arg5: memref<8x64xf32, #tpu.memory_space<vmem>>, %arg6: memref<4x64x64xf32, #tpu.memory_space<vmem>>, %arg7: memref<1x64x16xf32, #tpu.memory_space<vmem>>, %arg8: memref<1x16xf32, #tpu.memory_space<vmem>>, %arg9: memref<2x8xf32, #tpu.memory_space<vmem>>, %arg10: memref<2x24xf32, #tpu.memory_space<vmem>>, %arg11: memref<40x128xf32, #tpu.memory_space<vmem>>) attributes {dimension_semantics = [], scalar_prefetch = 0 : i64, scratch_operands = 1 : i64, tpu.core_type = #tpu.core_type<tc>} {
    %c0 = arith.constant 0 : index
    %c0_0 = arith.constant 0 : index
    %0 = vector.load %arg0[%c0, %c0_0] : memref<32x48xf32, #tpu.memory_space<vmem>>, vector<32x48xf32>
    %cst = arith.constant 0.000000e+00 : f32
    %1 = vector.broadcast %cst : f32 to vector<40x128xf32>
    %c0_1 = arith.constant 0 : index
    %c0_2 = arith.constant 0 : index
    %2 = vector.load %arg11[%c0_1, %c0_2] : memref<40x128xf32, #tpu.memory_space<vmem>>, vector<40x128xf32>
    tpu.vector_store %arg11[%c0_1, %c0_2], %1 {strides = array<i32>} : memref<40x128xf32, #tpu.memory_space<vmem>>, vector<40x128xf32>,
    %3 = vector.extract_strided_slice %0 {offsets = [0, 0], sizes = [16, 48], strides = [1, 1]} : vector<32x48xf32> to vector<16x48xf32>
    %c1 = arith.constant 1 : index
    %c0_3 = arith.constant 0 : index
    %4 = vector.load %arg11[%c1, %c0_3] : memref<40x128xf32, #tpu.memory_space<vmem>>, vector<16x48xf32>
    tpu.vector_store %arg11[%c1, %c0_3], %3 {strides = array<i32>} : memref<40x128xf32, #tpu.memory_space<vmem>>, vector<16x48xf32>,
    %5 = vector.extract_strided_slice %0 {offsets = [16, 0], sizes = [16, 48], strides = [1, 1]} : vector<32x48xf32> to vector<16x48xf32>
    %c19 = arith.constant 19 : index
    %c0_4 = arith.constant 0 : index
    %6 = vector.load %arg11[%c19, %c0_4] : memref<40x128xf32, #tpu.memory_space<vmem>>, vector<16x48xf32>
    tpu.vector_store %arg11[%c19, %c0_4], %5 {strides = array<i32>} : memref<40x128xf32, #tpu.memory_space<vmem>>, vector<16x48xf32>,
    %c0_5 = arith.constant 0 : index
    %c0_6 = arith.constant 0 : index
    %7 = tpu.strided_load %arg11[%c0_5, %c0_6] {strides = array<i32: 2, 1>} : memref<40x128xf32, #tpu.memory_space<vmem>>, vector<8x48xf32>
    %c18 = arith.constant 18 : index
    %c0_7 = arith.constant 0 : index
    %8 = tpu.strided_load %arg11[%c18, %c0_7] {strides = array<i32: 2, 1>} : memref<40x128xf32, #tpu.memory_space<vmem>>, vector<8x48xf32>
    %9 = tpu.concatenate %7, %8 in 0 : vector<8x48xf32>, vector<8x48xf32> -> vector<16x48xf32>
    %c0_8 = arith.constant 0 : index
    %c0_9 = arith.constant 0 : index
    %c0_10 = arith.constant 0 : index
    %10 = vector.load %arg1[%c0_8, %c0_9, %c0_10] : memref<4x48x64xf32, #tpu.memory_space<vmem>>, vector<1x48x64xf32>
    %11 = vector.shape_cast %10 : vector<1x48x64xf32> to vector<48x64xf32>
    %cst_11 = arith.constant dense<0.000000e+00> : vector<16x64xf32>
    %12 = tpu.matmul %9, %11, %cst_11 {dimension_numbers = #tpu.dot_dimension_numbers<[1], [0], [0], [1], [0, 0, 1, 1], [], []>} : vector<16x48xf32>, vector<48x64xf32>, vector<16x64xf32> -> vector<16x64xf32>
    %c1_12 = arith.constant 1 : index
    %c0_13 = arith.constant 0 : index
    %13 = tpu.strided_load %arg11[%c1_12, %c0_13] {strides = array<i32: 2, 1>} : memref<40x128xf32, #tpu.memory_space<vmem>>, vector<8x48xf32>
    %c19_14 = arith.constant 19 : index
    %c0_15 = arith.constant 0 : index
    %14 = tpu.strided_load %arg11[%c19_14, %c0_15] {strides = array<i32: 2, 1>} : memref<40x128xf32, #tpu.memory_space<vmem>>, vector<8x48xf32>
    %15 = tpu.concatenate %13, %14 in 0 : vector<8x48xf32>, vector<8x48xf32> -> vector<16x48xf32>
    %c1_16 = arith.constant 1 : index
    %c0_17 = arith.constant 0 : index
    %c0_18 = arith.constant 0 : index
    %16 = vector.load %arg1[%c1_16, %c0_17, %c0_18] : memref<4x48x64xf32, #tpu.memory_space<vmem>>, vector<1x48x64xf32>
    %17 = vector.shape_cast %16 : vector<1x48x64xf32> to vector<48x64xf32>
    %cst_19 = arith.constant dense<0.000000e+00> : vector<16x64xf32>
    %18 = tpu.matmul %15, %17, %cst_19 {dimension_numbers = #tpu.dot_dimension_numbers<[1], [0], [0], [1], [0, 0, 1, 1], [], []>} : vector<16x48xf32>, vector<48x64xf32>, vector<16x64xf32> -> vector<16x64xf32>
    %19 = arith.addf %12, %18 : vector<16x64xf32>
    %c2 = arith.constant 2 : index
    %c0_20 = arith.constant 0 : index
    %20 = tpu.strided_load %arg11[%c2, %c0_20] {strides = array<i32: 2, 1>} : memref<40x128xf32, #tpu.memory_space<vmem>>, vector<8x48xf32>
    %c20 = arith.constant 20 : index
    %c0_21 = arith.constant 0 : index
    %21 = tpu.strided_load %arg11[%c20, %c0_21] {strides = array<i32: 2, 1>} : memref<40x128xf32, #tpu.memory_space<vmem>>, vector<8x48xf32>
    %22 = tpu.concatenate %20, %21 in 0 : vector<8x48xf32>, vector<8x48xf32> -> vector<16x48xf32>
    %c2_22 = arith.constant 2 : index
    %c0_23 = arith.constant 0 : index
    %c0_24 = arith.constant 0 : index
    %23 = vector.load %arg1[%c2_22, %c0_23, %c0_24] : memref<4x48x64xf32, #tpu.memory_space<vmem>>, vector<1x48x64xf32>
    %24 = vector.shape_cast %23 : vector<1x48x64xf32> to vector<48x64xf32>
    %cst_25 = arith.constant dense<0.000000e+00> : vector<16x64xf32>
    %25 = tpu.matmul %22, %24, %cst_25 {dimension_numbers = #tpu.dot_dimension_numbers<[1], [0], [0], [1], [0, 0, 1, 1], [], []>} : vector<16x48xf32>, vector<48x64xf32>, vector<16x64xf32> -> vector<16x64xf32>
    %26 = arith.addf %19, %25 : vector<16x64xf32>
    %c3 = arith.constant 3 : index
    %c0_26 = arith.constant 0 : index
    %27 = tpu.strided_load %arg11[%c3, %c0_26] {strides = array<i32: 2, 1>} : memref<40x128xf32, #tpu.memory_space<vmem>>, vector<8x48xf32>
    %c21 = arith.constant 21 : index
    %c0_27 = arith.constant 0 : index
    %28 = tpu.strided_load %arg11[%c21, %c0_27] {strides = array<i32: 2, 1>} : memref<40x128xf32, #tpu.memory_space<vmem>>, vector<8x48xf32>
    %29 = tpu.concatenate %27, %28 in 0 : vector<8x48xf32>, vector<8x48xf32> -> vector<16x48xf32>
    %c3_28 = arith.constant 3 : index
    %c0_29 = arith.constant 0 : index
    %c0_30 = arith.constant 0 : index
    %30 = vector.load %arg1[%c3_28, %c0_29, %c0_30] : memref<4x48x64xf32, #tpu.memory_space<vmem>>, vector<1x48x64xf32>
    %31 = vector.shape_cast %30 : vector<1x48x64xf32> to vector<48x64xf32>
    %cst_31 = arith.constant dense<0.000000e+00> : vector<16x64xf32>
    %32 = tpu.matmul %29, %31, %cst_31 {dimension_numbers = #tpu.dot_dimension_numbers<[1], [0], [0], [1], [0, 0, 1, 1], [], []>} : vector<16x48xf32>, vector<48x64xf32>, vector<16x64xf32> -> vector<16x64xf32>
    %33 = arith.addf %26, %32 : vector<16x64xf32>
    %cst_32 = arith.constant dense<0.000000e+00> : vector<64xf32>
    %34 = vector.multi_reduction <add>, %33, %cst_32 [0] : vector<16x64xf32> to vector<64xf32>
    %35 = vector.shape_cast %34 : vector<64xf32> to vector<1x64xf32>
    %36 = arith.mulf %33, %33 : vector<16x64xf32>
    %cst_33 = arith.constant dense<0.000000e+00> : vector<64xf32>
    %37 = vector.multi_reduction <add>, %36, %cst_33 [0] : vector<16x64xf32> to vector<64xf32>
    %38 = vector.shape_cast %37 : vector<64xf32> to vector<1x64xf32>
    %39 = tpu.concatenate %35, %38 in 0 : vector<1x64xf32>, vector<1x64xf32> -> vector<2x64xf32>
    %c0_34 = arith.constant 0 : index
    %c0_35 = arith.constant 0 : index
    %c0_36 = arith.constant 0 : index
    %40 = vector.load %arg6[%c0_34, %c0_35, %c0_36] : memref<4x64x64xf32, #tpu.memory_space<vmem>>, vector<1x64x64xf32>
    %41 = vector.shape_cast %40 : vector<1x64x64xf32> to vector<64x64xf32>
    %42 = vector.extract_strided_slice %41 {offsets = [0, 0], sizes = [64, 8], strides = [1, 1]} : vector<64x64xf32> to vector<64x8xf32>
    %cst_37 = arith.constant dense<0.000000e+00> : vector<2x8xf32>
    %43 = tpu.matmul %39, %42, %cst_37 {dimension_numbers = #tpu.dot_dimension_numbers<[1], [0], [0], [1], [0, 0, 1, 1], [], []>} : vector<2x64xf32>, vector<64x8xf32>, vector<2x8xf32> -> vector<2x8xf32>
    %cst_38 = arith.constant 7.812500e-03 : f32
    %44 = vector.broadcast %cst_38 : f32 to vector<2x8xf32>
    %45 = arith.mulf %43, %44 : vector<2x8xf32>
    %46 = vector.extract_strided_slice %45 {offsets = [0, 0], sizes = [1, 8], strides = [1, 1]} : vector<2x8xf32> to vector<1x8xf32>
    %47 = vector.extract_strided_slice %45 {offsets = [1, 0], sizes = [1, 8], strides = [1, 1]} : vector<2x8xf32> to vector<1x8xf32>
    %48 = arith.mulf %46, %46 : vector<1x8xf32>
    %49 = arith.subf %47, %48 : vector<1x8xf32>
    %c0_39 = arith.constant 0 : index
    %c0_40 = arith.constant 0 : index
    %50 = vector.load %arg5[%c0_39, %c0_40] : memref<8x64xf32, #tpu.memory_space<vmem>>, vector<1x8xf32>
    %c1_41 = arith.constant 1 : index
    %c0_42 = arith.constant 0 : index
    %51 = vector.load %arg5[%c1_41, %c0_42] : memref<8x64xf32, #tpu.memory_space<vmem>>, vector<1x8xf32>
    %cst_43 = arith.constant 9.99999974E-6 : f32
    %52 = vector.broadcast %cst_43 : f32 to vector<1x8xf32>
    %53 = arith.addf %49, %52 : vector<1x8xf32>
    %54 = math.rsqrt %53 : vector<1x8xf32>
    %55 = arith.mulf %50, %54 : vector<1x8xf32>
    %56 = arith.mulf %46, %55 : vector<1x8xf32>
    %57 = arith.subf %51, %56 : vector<1x8xf32>
    %58 = tpu.concatenate %55, %55, %55, %55, %55, %55, %55, %55 in 1 : vector<1x8xf32>, vector<1x8xf32>, vector<1x8xf32>, vector<1x8xf32>, vector<1x8xf32>, vector<1x8xf32>, vector<1x8xf32>, vector<1x8xf32> -> vector<1x64xf32>
    %59 = tpu.concatenate %57, %57, %57, %57, %57, %57, %57, %57 in 1 : vector<1x8xf32>, vector<1x8xf32>, vector<1x8xf32>, vector<1x8xf32>, vector<1x8xf32>, vector<1x8xf32>, vector<1x8xf32>, vector<1x8xf32> -> vector<1x64xf32>
    %60 = vector.broadcast %58 : vector<1x64xf32> to vector<16x64xf32>
    %61 = arith.mulf %33, %60 : vector<16x64xf32>
    %62 = vector.broadcast %59 : vector<1x64xf32> to vector<16x64xf32>
    %63 = arith.addf %61, %62 : vector<16x64xf32>
    %cst_44 = arith.constant 2.000000e-01 : f32
    %64 = vector.broadcast %cst_44 : f32 to vector<16x64xf32>
    %65 = arith.mulf %64, %63 : vector<16x64xf32>
    %66 = arith.maximumf %63, %65 : vector<16x64xf32>
    %cst_45 = arith.constant 0.000000e+00 : f32
    %67 = vector.broadcast %cst_45 : f32 to vector<40x128xf32>
    %c0_46 = arith.constant 0 : index
    %c0_47 = arith.constant 0 : index
    %68 = vector.load %arg11[%c0_46, %c0_47] : memref<40x128xf32, #tpu.memory_space<vmem>>, vector<40x128xf32>
    tpu.vector_store %arg11[%c0_46, %c0_47], %67 {strides = array<i32>} : memref<40x128xf32, #tpu.memory_space<vmem>>, vector<40x128xf32>,
    %69 = vector.extract_strided_slice %66 {offsets = [0, 0], sizes = [8, 64], strides = [1, 1]} : vector<16x64xf32> to vector<8x64xf32>
    %c1_48 = arith.constant 1 : index
    %c0_49 = arith.constant 0 : index
    %70 = vector.load %arg11[%c1_48, %c0_49] : memref<40x128xf32, #tpu.memory_space<vmem>>, vector<8x64xf32>
    tpu.vector_store %arg11[%c1_48, %c0_49], %69 {strides = array<i32>} : memref<40x128xf32, #tpu.memory_space<vmem>>, vector<8x64xf32>,
    %71 = vector.extract_strided_slice %66 {offsets = [8, 0], sizes = [8, 64], strides = [1, 1]} : vector<16x64xf32> to vector<8x64xf32>
    %c11 = arith.constant 11 : index
    %c0_50 = arith.constant 0 : index
    %72 = vector.load %arg11[%c11, %c0_50] : memref<40x128xf32, #tpu.memory_space<vmem>>, vector<8x64xf32>
    tpu.vector_store %arg11[%c11, %c0_50], %71 {strides = array<i32>} : memref<40x128xf32, #tpu.memory_space<vmem>>, vector<8x64xf32>,
    %c0_51 = arith.constant 0 : index
    %c0_52 = arith.constant 0 : index
    %73 = tpu.strided_load %arg11[%c0_51, %c0_52] {strides = array<i32: 2, 1>} : memref<40x128xf32, #tpu.memory_space<vmem>>, vector<4x64xf32>
    %c10 = arith.constant 10 : index
    %c0_53 = arith.constant 0 : index
    %74 = tpu.strided_load %arg11[%c10, %c0_53] {strides = array<i32: 2, 1>} : memref<40x128xf32, #tpu.memory_space<vmem>>, vector<4x64xf32>
    %75 = tpu.concatenate %73, %74 in 0 : vector<4x64xf32>, vector<4x64xf32> -> vector<8x64xf32>
    %c0_54 = arith.constant 0 : index
    %c0_55 = arith.constant 0 : index
    %c0_56 = arith.constant 0 : index
    %76 = vector.load %arg2[%c0_54, %c0_55, %c0_56] : memref<4x64x64xf32, #tpu.memory_space<vmem>>, vector<1x64x64xf32>
    %77 = vector.shape_cast %76 : vector<1x64x64xf32> to vector<64x64xf32>
    %cst_57 = arith.constant dense<0.000000e+00> : vector<8x64xf32>
    %78 = tpu.matmul %75, %77, %cst_57 {dimension_numbers = #tpu.dot_dimension_numbers<[1], [0], [0], [1], [0, 0, 1, 1], [], []>} : vector<8x64xf32>, vector<64x64xf32>, vector<8x64xf32> -> vector<8x64xf32>
    %c1_58 = arith.constant 1 : index
    %c0_59 = arith.constant 0 : index
    %79 = tpu.strided_load %arg11[%c1_58, %c0_59] {strides = array<i32: 2, 1>} : memref<40x128xf32, #tpu.memory_space<vmem>>, vector<4x64xf32>
    %c11_60 = arith.constant 11 : index
    %c0_61 = arith.constant 0 : index
    %80 = tpu.strided_load %arg11[%c11_60, %c0_61] {strides = array<i32: 2, 1>} : memref<40x128xf32, #tpu.memory_space<vmem>>, vector<4x64xf32>
    %81 = tpu.concatenate %79, %80 in 0 : vector<4x64xf32>, vector<4x64xf32> -> vector<8x64xf32>
    %c1_62 = arith.constant 1 : index
    %c0_63 = arith.constant 0 : index
    %c0_64 = arith.constant 0 : index
    %82 = vector.load %arg2[%c1_62, %c0_63, %c0_64] : memref<4x64x64xf32, #tpu.memory_space<vmem>>, vector<1x64x64xf32>
    %83 = vector.shape_cast %82 : vector<1x64x64xf32> to vector<64x64xf32>
    %cst_65 = arith.constant dense<0.000000e+00> : vector<8x64xf32>
    %84 = tpu.matmul %81, %83, %cst_65 {dimension_numbers = #tpu.dot_dimension_numbers<[1], [0], [0], [1], [0, 0, 1, 1], [], []>} : vector<8x64xf32>, vector<64x64xf32>, vector<8x64xf32> -> vector<8x64xf32>
    %85 = arith.addf %78, %84 : vector<8x64xf32>
    %c2_66 = arith.constant 2 : index
    %c0_67 = arith.constant 0 : index
    %86 = tpu.strided_load %arg11[%c2_66, %c0_67] {strides = array<i32: 2, 1>} : memref<40x128xf32, #tpu.memory_space<vmem>>, vector<4x64xf32>
    %c12 = arith.constant 12 : index
    %c0_68 = arith.constant 0 : index
    %87 = tpu.strided_load %arg11[%c12, %c0_68] {strides = array<i32: 2, 1>} : memref<40x128xf32, #tpu.memory_space<vmem>>, vector<4x64xf32>
    %88 = tpu.concatenate %86, %87 in 0 : vector<4x64xf32>, vector<4x64xf32> -> vector<8x64xf32>
    %c2_69 = arith.constant 2 : index
    %c0_70 = arith.constant 0 : index
    %c0_71 = arith.constant 0 : index
    %89 = vector.load %arg2[%c2_69, %c0_70, %c0_71] : memref<4x64x64xf32, #tpu.memory_space<vmem>>, vector<1x64x64xf32>
    %90 = vector.shape_cast %89 : vector<1x64x64xf32> to vector<64x64xf32>
    %cst_72 = arith.constant dense<0.000000e+00> : vector<8x64xf32>
    %91 = tpu.matmul %88, %90, %cst_72 {dimension_numbers = #tpu.dot_dimension_numbers<[1], [0], [0], [1], [0, 0, 1, 1], [], []>} : vector<8x64xf32>, vector<64x64xf32>, vector<8x64xf32> -> vector<8x64xf32>
    %92 = arith.addf %85, %91 : vector<8x64xf32>
    %c3_73 = arith.constant 3 : index
    %c0_74 = arith.constant 0 : index
    %93 = tpu.strided_load %arg11[%c3_73, %c0_74] {strides = array<i32: 2, 1>} : memref<40x128xf32, #tpu.memory_space<vmem>>, vector<4x64xf32>
    %c13 = arith.constant 13 : index
    %c0_75 = arith.constant 0 : index
    %94 = tpu.strided_load %arg11[%c13, %c0_75] {strides = array<i32: 2, 1>} : memref<40x128xf32, #tpu.memory_space<vmem>>, vector<4x64xf32>
    %95 = tpu.concatenate %93, %94 in 0 : vector<4x64xf32>, vector<4x64xf32> -> vector<8x64xf32>
    %c3_76 = arith.constant 3 : index
    %c0_77 = arith.constant 0 : index
    %c0_78 = arith.constant 0 : index
    %96 = vector.load %arg2[%c3_76, %c0_77, %c0_78] : memref<4x64x64xf32, #tpu.memory_space<vmem>>, vector<1x64x64xf32>
    %97 = vector.shape_cast %96 : vector<1x64x64xf32> to vector<64x64xf32>
    %cst_79 = arith.constant dense<0.000000e+00> : vector<8x64xf32>
    %98 = tpu.matmul %95, %97, %cst_79 {dimension_numbers = #tpu.dot_dimension_numbers<[1], [0], [0], [1], [0, 0, 1, 1], [], []>} : vector<8x64xf32>, vector<64x64xf32>, vector<8x64xf32> -> vector<8x64xf32>
    %99 = arith.addf %92, %98 : vector<8x64xf32>
    %cst_80 = arith.constant dense<0.000000e+00> : vector<64xf32>
    %100 = vector.multi_reduction <add>, %99, %cst_80 [0] : vector<8x64xf32> to vector<64xf32>
    %101 = vector.shape_cast %100 : vector<64xf32> to vector<1x64xf32>
    %102 = arith.mulf %99, %99 : vector<8x64xf32>
    %cst_81 = arith.constant dense<0.000000e+00> : vector<64xf32>
    %103 = vector.multi_reduction <add>, %102, %cst_81 [0] : vector<8x64xf32> to vector<64xf32>
    %104 = vector.shape_cast %103 : vector<64xf32> to vector<1x64xf32>
    %105 = tpu.concatenate %101, %104 in 0 : vector<1x64xf32>, vector<1x64xf32> -> vector<2x64xf32>
    %c1_82 = arith.constant 1 : index
    %c0_83 = arith.constant 0 : index
    %c0_84 = arith.constant 0 : index
    %106 = vector.load %arg6[%c1_82, %c0_83, %c0_84] : memref<4x64x64xf32, #tpu.memory_space<vmem>>, vector<1x64x64xf32>
    %107 = vector.shape_cast %106 : vector<1x64x64xf32> to vector<64x64xf32>
    %108 = vector.extract_strided_slice %107 {offsets = [0, 0], sizes = [64, 16], strides = [1, 1]} : vector<64x64xf32> to vector<64x16xf32>
    %cst_85 = arith.constant dense<0.000000e+00> : vector<2x16xf32>
    %109 = tpu.matmul %105, %108, %cst_85 {dimension_numbers = #tpu.dot_dimension_numbers<[1], [0], [0], [1], [0, 0, 1, 1], [], []>} : vector<2x64xf32>, vector<64x16xf32>, vector<2x16xf32> -> vector<2x16xf32>
    %cst_86 = arith.constant 3.125000e-02 : f32
    %110 = vector.broadcast %cst_86 : f32 to vector<2x16xf32>
    %111 = arith.mulf %109, %110 : vector<2x16xf32>
    %112 = vector.extract_strided_slice %111 {offsets = [0, 0], sizes = [1, 16], strides = [1, 1]} : vector<2x16xf32> to vector<1x16xf32>
    %113 = vector.extract_strided_slice %111 {offsets = [1, 0], sizes = [1, 16], strides = [1, 1]} : vector<2x16xf32> to vector<1x16xf32>
    %114 = arith.mulf %112, %112 : vector<1x16xf32>
    %115 = arith.subf %113, %114 : vector<1x16xf32>
    %c2_87 = arith.constant 2 : index
    %c0_88 = arith.constant 0 : index
    %116 = vector.load %arg5[%c2_87, %c0_88] : memref<8x64xf32, #tpu.memory_space<vmem>>, vector<1x16xf32>
    %c3_89 = arith.constant 3 : index
    %c0_90 = arith.constant 0 : index
    %117 = vector.load %arg5[%c3_89, %c0_90] : memref<8x64xf32, #tpu.memory_space<vmem>>, vector<1x16xf32>
    %cst_91 = arith.constant 9.99999974E-6 : f32
    %118 = vector.broadcast %cst_91 : f32 to vector<1x16xf32>
    %119 = arith.addf %115, %118 : vector<1x16xf32>
    %120 = math.rsqrt %119 : vector<1x16xf32>
    %121 = arith.mulf %116, %120 : vector<1x16xf32>
    %122 = arith.mulf %112, %121 : vector<1x16xf32>
    %123 = arith.subf %117, %122 : vector<1x16xf32>
    %124 = tpu.concatenate %121, %121, %121, %121 in 1 : vector<1x16xf32>, vector<1x16xf32>, vector<1x16xf32>, vector<1x16xf32> -> vector<1x64xf32>
    %125 = tpu.concatenate %123, %123, %123, %123 in 1 : vector<1x16xf32>, vector<1x16xf32>, vector<1x16xf32>, vector<1x16xf32> -> vector<1x64xf32>
    %126 = vector.broadcast %124 : vector<1x64xf32> to vector<8x64xf32>
    %127 = arith.mulf %99, %126 : vector<8x64xf32>
    %128 = vector.broadcast %125 : vector<1x64xf32> to vector<8x64xf32>
    %129 = arith.addf %127, %128 : vector<8x64xf32>
    %cst_92 = arith.constant 2.000000e-01 : f32
    %130 = vector.broadcast %cst_92 : f32 to vector<8x64xf32>
    %131 = arith.mulf %130, %129 : vector<8x64xf32>
    %132 = arith.maximumf %129, %131 : vector<8x64xf32>
    %cst_93 = arith.constant 0.000000e+00 : f32
    %133 = vector.broadcast %cst_93 : f32 to vector<40x128xf32>
    %c0_94 = arith.constant 0 : index
    %c0_95 = arith.constant 0 : index
    %134 = vector.load %arg11[%c0_94, %c0_95] : memref<40x128xf32, #tpu.memory_space<vmem>>, vector<40x128xf32>
    tpu.vector_store %arg11[%c0_94, %c0_95], %133 {strides = array<i32>} : memref<40x128xf32, #tpu.memory_space<vmem>>, vector<40x128xf32>,
    %135 = vector.extract_strided_slice %132 {offsets = [0, 0], sizes = [4, 64], strides = [1, 1]} : vector<8x64xf32> to vector<4x64xf32>
    %c1_96 = arith.constant 1 : index
    %c0_97 = arith.constant 0 : index
    %136 = vector.load %arg11[%c1_96, %c0_97] : memref<40x128xf32, #tpu.memory_space<vmem>>, vector<4x64xf32>
    tpu.vector_store %arg11[%c1_96, %c0_97], %135 {strides = array<i32>} : memref<40x128xf32, #tpu.memory_space<vmem>>, vector<4x64xf32>,
    %137 = vector.extract_strided_slice %132 {offsets = [4, 0], sizes = [4, 64], strides = [1, 1]} : vector<8x64xf32> to vector<4x64xf32>
    %c7 = arith.constant 7 : index
    %c0_98 = arith.constant 0 : index
    %138 = vector.load %arg11[%c7, %c0_98] : memref<40x128xf32, #tpu.memory_space<vmem>>, vector<4x64xf32>
    tpu.vector_store %arg11[%c7, %c0_98], %137 {strides = array<i32>} : memref<40x128xf32, #tpu.memory_space<vmem>>, vector<4x64xf32>,
    %c0_99 = arith.constant 0 : index
    %c0_100 = arith.constant 0 : index
    %139 = tpu.strided_load %arg11[%c0_99, %c0_100] {strides = array<i32: 2, 1>} : memref<40x128xf32, #tpu.memory_space<vmem>>, vector<2x64xf32>
    %c6 = arith.constant 6 : index
    %c0_101 = arith.constant 0 : index
    %140 = tpu.strided_load %arg11[%c6, %c0_101] {strides = array<i32: 2, 1>} : memref<40x128xf32, #tpu.memory_space<vmem>>, vector<2x64xf32>
    %141 = tpu.concatenate %139, %140 in 0 : vector<2x64xf32>, vector<2x64xf32> -> vector<4x64xf32>
    %c0_102 = arith.constant 0 : index
    %c0_103 = arith.constant 0 : index
    %c0_104 = arith.constant 0 : index
    %142 = vector.load %arg3[%c0_102, %c0_103, %c0_104] : memref<4x64x64xf32, #tpu.memory_space<vmem>>, vector<1x64x64xf32>
    %143 = vector.shape_cast %142 : vector<1x64x64xf32> to vector<64x64xf32>
    %cst_105 = arith.constant dense<0.000000e+00> : vector<4x64xf32>
    %144 = tpu.matmul %141, %143, %cst_105 {dimension_numbers = #tpu.dot_dimension_numbers<[1], [0], [0], [1], [0, 0, 1, 1], [], []>} : vector<4x64xf32>, vector<64x64xf32>, vector<4x64xf32> -> vector<4x64xf32>
    %c1_106 = arith.constant 1 : index
    %c0_107 = arith.constant 0 : index
    %145 = tpu.strided_load %arg11[%c1_106, %c0_107] {strides = array<i32: 2, 1>} : memref<40x128xf32, #tpu.memory_space<vmem>>, vector<2x64xf32>
    %c7_108 = arith.constant 7 : index
    %c0_109 = arith.constant 0 : index
    %146 = tpu.strided_load %arg11[%c7_108, %c0_109] {strides = array<i32: 2, 1>} : memref<40x128xf32, #tpu.memory_space<vmem>>, vector<2x64xf32>
    %147 = tpu.concatenate %145, %146 in 0 : vector<2x64xf32>, vector<2x64xf32> -> vector<4x64xf32>
    %c1_110 = arith.constant 1 : index
    %c0_111 = arith.constant 0 : index
    %c0_112 = arith.constant 0 : index
    %148 = vector.load %arg3[%c1_110, %c0_111, %c0_112] : memref<4x64x64xf32, #tpu.memory_space<vmem>>, vector<1x64x64xf32>
    %149 = vector.shape_cast %148 : vector<1x64x64xf32> to vector<64x64xf32>
    %cst_113 = arith.constant dense<0.000000e+00> : vector<4x64xf32>
    %150 = tpu.matmul %147, %149, %cst_113 {dimension_numbers = #tpu.dot_dimension_numbers<[1], [0], [0], [1], [0, 0, 1, 1], [], []>} : vector<4x64xf32>, vector<64x64xf32>, vector<4x64xf32> -> vector<4x64xf32>
    %151 = arith.addf %144, %150 : vector<4x64xf32>
    %c2_114 = arith.constant 2 : index
    %c0_115 = arith.constant 0 : index
    %152 = tpu.strided_load %arg11[%c2_114, %c0_115] {strides = array<i32: 2, 1>} : memref<40x128xf32, #tpu.memory_space<vmem>>, vector<2x64xf32>
    %c8 = arith.constant 8 : index
    %c0_116 = arith.constant 0 : index
    %153 = tpu.strided_load %arg11[%c8, %c0_116] {strides = array<i32: 2, 1>} : memref<40x128xf32, #tpu.memory_space<vmem>>, vector<2x64xf32>
    %154 = tpu.concatenate %152, %153 in 0 : vector<2x64xf32>, vector<2x64xf32> -> vector<4x64xf32>
    %c2_117 = arith.constant 2 : index
    %c0_118 = arith.constant 0 : index
    %c0_119 = arith.constant 0 : index
    %155 = vector.load %arg3[%c2_117, %c0_118, %c0_119] : memref<4x64x64xf32, #tpu.memory_space<vmem>>, vector<1x64x64xf32>
    %156 = vector.shape_cast %155 : vector<1x64x64xf32> to vector<64x64xf32>
    %cst_120 = arith.constant dense<0.000000e+00> : vector<4x64xf32>
    %157 = tpu.matmul %154, %156, %cst_120 {dimension_numbers = #tpu.dot_dimension_numbers<[1], [0], [0], [1], [0, 0, 1, 1], [], []>} : vector<4x64xf32>, vector<64x64xf32>, vector<4x64xf32> -> vector<4x64xf32>
    %158 = arith.addf %151, %157 : vector<4x64xf32>
    %c3_121 = arith.constant 3 : index
    %c0_122 = arith.constant 0 : index
    %159 = tpu.strided_load %arg11[%c3_121, %c0_122] {strides = array<i32: 2, 1>} : memref<40x128xf32, #tpu.memory_space<vmem>>, vector<2x64xf32>
    %c9 = arith.constant 9 : index
    %c0_123 = arith.constant 0 : index
    %160 = tpu.strided_load %arg11[%c9, %c0_123] {strides = array<i32: 2, 1>} : memref<40x128xf32, #tpu.memory_space<vmem>>, vector<2x64xf32>
    %161 = tpu.concatenate %159, %160 in 0 : vector<2x64xf32>, vector<2x64xf32> -> vector<4x64xf32>
    %c3_124 = arith.constant 3 : index
    %c0_125 = arith.constant 0 : index
    %c0_126 = arith.constant 0 : index
    %162 = vector.load %arg3[%c3_124, %c0_125, %c0_126] : memref<4x64x64xf32, #tpu.memory_space<vmem>>, vector<1x64x64xf32>
    %163 = vector.shape_cast %162 : vector<1x64x64xf32> to vector<64x64xf32>
    %cst_127 = arith.constant dense<0.000000e+00> : vector<4x64xf32>
    %164 = tpu.matmul %161, %163, %cst_127 {dimension_numbers = #tpu.dot_dimension_numbers<[1], [0], [0], [1], [0, 0, 1, 1], [], []>} : vector<4x64xf32>, vector<64x64xf32>, vector<4x64xf32> -> vector<4x64xf32>
    %165 = arith.addf %158, %164 : vector<4x64xf32>
    %cst_128 = arith.constant dense<0.000000e+00> : vector<64xf32>
    %166 = vector.multi_reduction <add>, %165, %cst_128 [0] : vector<4x64xf32> to vector<64xf32>
    %167 = vector.shape_cast %166 : vector<64xf32> to vector<1x64xf32>
    %168 = arith.mulf %165, %165 : vector<4x64xf32>
    %cst_129 = arith.constant dense<0.000000e+00> : vector<64xf32>
    %169 = vector.multi_reduction <add>, %168, %cst_129 [0] : vector<4x64xf32> to vector<64xf32>
    %170 = vector.shape_cast %169 : vector<64xf32> to vector<1x64xf32>
    %171 = tpu.concatenate %167, %170 in 0 : vector<1x64xf32>, vector<1x64xf32> -> vector<2x64xf32>
    %c2_130 = arith.constant 2 : index
    %c0_131 = arith.constant 0 : index
    %c0_132 = arith.constant 0 : index
    %172 = vector.load %arg6[%c2_130, %c0_131, %c0_132] : memref<4x64x64xf32, #tpu.memory_space<vmem>>, vector<1x64x64xf32>
    %173 = vector.shape_cast %172 : vector<1x64x64xf32> to vector<64x64xf32>
    %174 = vector.extract_strided_slice %173 {offsets = [0, 0], sizes = [64, 32], strides = [1, 1]} : vector<64x64xf32> to vector<64x32xf32>
    %cst_133 = arith.constant dense<0.000000e+00> : vector<2x32xf32>
    %175 = tpu.matmul %171, %174, %cst_133 {dimension_numbers = #tpu.dot_dimension_numbers<[1], [0], [0], [1], [0, 0, 1, 1], [], []>} : vector<2x64xf32>, vector<64x32xf32>, vector<2x32xf32> -> vector<2x32xf32>
    %cst_134 = arith.constant 1.250000e-01 : f32
    %176 = vector.broadcast %cst_134 : f32 to vector<2x32xf32>
    %177 = arith.mulf %175, %176 : vector<2x32xf32>
    %178 = vector.extract_strided_slice %177 {offsets = [0, 0], sizes = [1, 32], strides = [1, 1]} : vector<2x32xf32> to vector<1x32xf32>
    %179 = vector.extract_strided_slice %177 {offsets = [1, 0], sizes = [1, 32], strides = [1, 1]} : vector<2x32xf32> to vector<1x32xf32>
    %180 = arith.mulf %178, %178 : vector<1x32xf32>
    %181 = arith.subf %179, %180 : vector<1x32xf32>
    %c4 = arith.constant 4 : index
    %c0_135 = arith.constant 0 : index
    %182 = vector.load %arg5[%c4, %c0_135] : memref<8x64xf32, #tpu.memory_space<vmem>>, vector<1x32xf32>
    %c5 = arith.constant 5 : index
    %c0_136 = arith.constant 0 : index
    %183 = vector.load %arg5[%c5, %c0_136] : memref<8x64xf32, #tpu.memory_space<vmem>>, vector<1x32xf32>
    %cst_137 = arith.constant 9.99999974E-6 : f32
    %184 = vector.broadcast %cst_137 : f32 to vector<1x32xf32>
    %185 = arith.addf %181, %184 : vector<1x32xf32>
    %186 = math.rsqrt %185 : vector<1x32xf32>
    %187 = arith.mulf %182, %186 : vector<1x32xf32>
    %188 = arith.mulf %178, %187 : vector<1x32xf32>
    %189 = arith.subf %183, %188 : vector<1x32xf32>
    %190 = tpu.concatenate %187, %187 in 1 : vector<1x32xf32>, vector<1x32xf32> -> vector<1x64xf32>
    %191 = tpu.concatenate %189, %189 in 1 : vector<1x32xf32>, vector<1x32xf32> -> vector<1x64xf32>
    %192 = vector.broadcast %190 : vector<1x64xf32> to vector<4x64xf32>
    %193 = arith.mulf %165, %192 : vector<4x64xf32>
    %194 = vector.broadcast %191 : vector<1x64xf32> to vector<4x64xf32>
    %195 = arith.addf %193, %194 : vector<4x64xf32>
    %cst_138 = arith.constant 2.000000e-01 : f32
    %196 = vector.broadcast %cst_138 : f32 to vector<4x64xf32>
    %197 = arith.mulf %196, %195 : vector<4x64xf32>
    %198 = arith.maximumf %195, %197 : vector<4x64xf32>
    %cst_139 = arith.constant 0.000000e+00 : f32
    %199 = vector.broadcast %cst_139 : f32 to vector<40x128xf32>
    %c0_140 = arith.constant 0 : index
    %c0_141 = arith.constant 0 : index
    %200 = vector.load %arg11[%c0_140, %c0_141] : memref<40x128xf32, #tpu.memory_space<vmem>>, vector<40x128xf32>
    tpu.vector_store %arg11[%c0_140, %c0_141], %199 {strides = array<i32>} : memref<40x128xf32, #tpu.memory_space<vmem>>, vector<40x128xf32>,
    %201 = vector.extract_strided_slice %198 {offsets = [0, 0], sizes = [2, 64], strides = [1, 1]} : vector<4x64xf32> to vector<2x64xf32>
    %c1_142 = arith.constant 1 : index
    %c0_143 = arith.constant 0 : index
    %202 = vector.load %arg11[%c1_142, %c0_143] : memref<40x128xf32, #tpu.memory_space<vmem>>, vector<2x64xf32>
    tpu.vector_store %arg11[%c1_142, %c0_143], %201 {strides = array<i32>} : memref<40x128xf32, #tpu.memory_space<vmem>>, vector<2x64xf32>,
    %203 = vector.extract_strided_slice %198 {offsets = [2, 0], sizes = [2, 64], strides = [1, 1]} : vector<4x64xf32> to vector<2x64xf32>
    %c5_144 = arith.constant 5 : index
    %c0_145 = arith.constant 0 : index
    %204 = vector.load %arg11[%c5_144, %c0_145] : memref<40x128xf32, #tpu.memory_space<vmem>>, vector<2x64xf32>
    tpu.vector_store %arg11[%c5_144, %c0_145], %203 {strides = array<i32>} : memref<40x128xf32, #tpu.memory_space<vmem>>, vector<2x64xf32>,
    %c0_146 = arith.constant 0 : index
    %c0_147 = arith.constant 0 : index
    %205 = tpu.strided_load %arg11[%c0_146, %c0_147] {strides = array<i32: 2, 1>} : memref<40x128xf32, #tpu.memory_space<vmem>>, vector<1x64xf32>
    %c4_148 = arith.constant 4 : index
    %c0_149 = arith.constant 0 : index
    %206 = tpu.strided_load %arg11[%c4_148, %c0_149] {strides = array<i32: 2, 1>} : memref<40x128xf32, #tpu.memory_space<vmem>>, vector<1x64xf32>
    %207 = tpu.concatenate %205, %206 in 0 : vector<1x64xf32>, vector<1x64xf32> -> vector<2x64xf32>
    %c0_150 = arith.constant 0 : index
    %c0_151 = arith.constant 0 : index
    %c0_152 = arith.constant 0 : index
    %208 = vector.load %arg4[%c0_150, %c0_151, %c0_152] : memref<4x64x64xf32, #tpu.memory_space<vmem>>, vector<1x64x64xf32>
    %209 = vector.shape_cast %208 : vector<1x64x64xf32> to vector<64x64xf32>
    %cst_153 = arith.constant dense<0.000000e+00> : vector<2x64xf32>
    %210 = tpu.matmul %207, %209, %cst_153 {dimension_numbers = #tpu.dot_dimension_numbers<[1], [0], [0], [1], [0, 0, 1, 1], [], []>} : vector<2x64xf32>, vector<64x64xf32>, vector<2x64xf32> -> vector<2x64xf32>
    %c1_154 = arith.constant 1 : index
    %c0_155 = arith.constant 0 : index
    %211 = tpu.strided_load %arg11[%c1_154, %c0_155] {strides = array<i32: 2, 1>} : memref<40x128xf32, #tpu.memory_space<vmem>>, vector<1x64xf32>
    %c5_156 = arith.constant 5 : index
    %c0_157 = arith.constant 0 : index
    %212 = tpu.strided_load %arg11[%c5_156, %c0_157] {strides = array<i32: 2, 1>} : memref<40x128xf32, #tpu.memory_space<vmem>>, vector<1x64xf32>
    %213 = tpu.concatenate %211, %212 in 0 : vector<1x64xf32>, vector<1x64xf32> -> vector<2x64xf32>
    %c1_158 = arith.constant 1 : index
    %c0_159 = arith.constant 0 : index
    %c0_160 = arith.constant 0 : index
    %214 = vector.load %arg4[%c1_158, %c0_159, %c0_160] : memref<4x64x64xf32, #tpu.memory_space<vmem>>, vector<1x64x64xf32>
    %215 = vector.shape_cast %214 : vector<1x64x64xf32> to vector<64x64xf32>
    %cst_161 = arith.constant dense<0.000000e+00> : vector<2x64xf32>
    %216 = tpu.matmul %213, %215, %cst_161 {dimension_numbers = #tpu.dot_dimension_numbers<[1], [0], [0], [1], [0, 0, 1, 1], [], []>} : vector<2x64xf32>, vector<64x64xf32>, vector<2x64xf32> -> vector<2x64xf32>
    %217 = arith.addf %210, %216 : vector<2x64xf32>
    %c2_162 = arith.constant 2 : index
    %c0_163 = arith.constant 0 : index
    %218 = tpu.strided_load %arg11[%c2_162, %c0_163] {strides = array<i32: 2, 1>} : memref<40x128xf32, #tpu.memory_space<vmem>>, vector<1x64xf32>
    %c6_164 = arith.constant 6 : index
    %c0_165 = arith.constant 0 : index
    %219 = tpu.strided_load %arg11[%c6_164, %c0_165] {strides = array<i32: 2, 1>} : memref<40x128xf32, #tpu.memory_space<vmem>>, vector<1x64xf32>
    %220 = tpu.concatenate %218, %219 in 0 : vector<1x64xf32>, vector<1x64xf32> -> vector<2x64xf32>
    %c2_166 = arith.constant 2 : index
    %c0_167 = arith.constant 0 : index
    %c0_168 = arith.constant 0 : index
    %221 = vector.load %arg4[%c2_166, %c0_167, %c0_168] : memref<4x64x64xf32, #tpu.memory_space<vmem>>, vector<1x64x64xf32>
    %222 = vector.shape_cast %221 : vector<1x64x64xf32> to vector<64x64xf32>
    %cst_169 = arith.constant dense<0.000000e+00> : vector<2x64xf32>
    %223 = tpu.matmul %220, %222, %cst_169 {dimension_numbers = #tpu.dot_dimension_numbers<[1], [0], [0], [1], [0, 0, 1, 1], [], []>} : vector<2x64xf32>, vector<64x64xf32>, vector<2x64xf32> -> vector<2x64xf32>
    %224 = arith.addf %217, %223 : vector<2x64xf32>
    %c3_170 = arith.constant 3 : index
    %c0_171 = arith.constant 0 : index
    %225 = tpu.strided_load %arg11[%c3_170, %c0_171] {strides = array<i32: 2, 1>} : memref<40x128xf32, #tpu.memory_space<vmem>>, vector<1x64xf32>
    %c7_172 = arith.constant 7 : index
    %c0_173 = arith.constant 0 : index
    %226 = tpu.strided_load %arg11[%c7_172, %c0_173] {strides = array<i32: 2, 1>} : memref<40x128xf32, #tpu.memory_space<vmem>>, vector<1x64xf32>
    %227 = tpu.concatenate %225, %226 in 0 : vector<1x64xf32>, vector<1x64xf32> -> vector<2x64xf32>
    %c3_174 = arith.constant 3 : index
    %c0_175 = arith.constant 0 : index
    %c0_176 = arith.constant 0 : index
    %228 = vector.load %arg4[%c3_174, %c0_175, %c0_176] : memref<4x64x64xf32, #tpu.memory_space<vmem>>, vector<1x64x64xf32>
    %229 = vector.shape_cast %228 : vector<1x64x64xf32> to vector<64x64xf32>
    %cst_177 = arith.constant dense<0.000000e+00> : vector<2x64xf32>
    %230 = tpu.matmul %227, %229, %cst_177 {dimension_numbers = #tpu.dot_dimension_numbers<[1], [0], [0], [1], [0, 0, 1, 1], [], []>} : vector<2x64xf32>, vector<64x64xf32>, vector<2x64xf32> -> vector<2x64xf32>
    %231 = arith.addf %224, %230 : vector<2x64xf32>
    %cst_178 = arith.constant dense<0.000000e+00> : vector<64xf32>
    %232 = vector.multi_reduction <add>, %231, %cst_178 [0] : vector<2x64xf32> to vector<64xf32>
    %233 = vector.shape_cast %232 : vector<64xf32> to vector<1x64xf32>
    %234 = arith.mulf %231, %231 : vector<2x64xf32>
    %cst_179 = arith.constant dense<0.000000e+00> : vector<64xf32>
    %235 = vector.multi_reduction <add>, %234, %cst_179 [0] : vector<2x64xf32> to vector<64xf32>
    %236 = vector.shape_cast %235 : vector<64xf32> to vector<1x64xf32>
    %237 = tpu.concatenate %233, %236 in 0 : vector<1x64xf32>, vector<1x64xf32> -> vector<2x64xf32>
    %c3_180 = arith.constant 3 : index
    %c0_181 = arith.constant 0 : index
    %c0_182 = arith.constant 0 : index
    %238 = vector.load %arg6[%c3_180, %c0_181, %c0_182] : memref<4x64x64xf32, #tpu.memory_space<vmem>>, vector<1x64x64xf32>
    %239 = vector.shape_cast %238 : vector<1x64x64xf32> to vector<64x64xf32>
    %cst_183 = arith.constant dense<0.000000e+00> : vector<2x64xf32>
    %240 = tpu.matmul %237, %239, %cst_183 {dimension_numbers = #tpu.dot_dimension_numbers<[1], [0], [0], [1], [0, 0, 1, 1], [], []>} : vector<2x64xf32>, vector<64x64xf32>, vector<2x64xf32> -> vector<2x64xf32>
    %cst_184 = arith.constant 5.000000e-01 : f32
    %241 = vector.broadcast %cst_184 : f32 to vector<2x64xf32>
    %242 = arith.mulf %240, %241 : vector<2x64xf32>
    %243 = vector.extract_strided_slice %242 {offsets = [0, 0], sizes = [1, 64], strides = [1, 1]} : vector<2x64xf32> to vector<1x64xf32>
    %244 = vector.extract_strided_slice %242 {offsets = [1, 0], sizes = [1, 64], strides = [1, 1]} : vector<2x64xf32> to vector<1x64xf32>
    %245 = arith.mulf %243, %243 : vector<1x64xf32>
    %246 = arith.subf %244, %245 : vector<1x64xf32>
    %c6_185 = arith.constant 6 : index
    %c0_186 = arith.constant 0 : index
    %247 = vector.load %arg5[%c6_185, %c0_186] : memref<8x64xf32, #tpu.memory_space<vmem>>, vector<1x64xf32>
    %c7_187 = arith.constant 7 : index
    %c0_188 = arith.constant 0 : index
    %248 = vector.load %arg5[%c7_187, %c0_188] : memref<8x64xf32, #tpu.memory_space<vmem>>, vector<1x64xf32>
    %cst_189 = arith.constant 9.99999974E-6 : f32
    %249 = vector.broadcast %cst_189 : f32 to vector<1x64xf32>
    %250 = arith.addf %246, %249 : vector<1x64xf32>
    %251 = math.rsqrt %250 : vector<1x64xf32>
    %252 = arith.mulf %247, %251 : vector<1x64xf32>
    %253 = arith.mulf %243, %252 : vector<1x64xf32>
    %254 = arith.subf %248, %253 : vector<1x64xf32>
    %255 = vector.broadcast %252 : vector<1x64xf32> to vector<2x64xf32>
    %256 = arith.mulf %231, %255 : vector<2x64xf32>
    %257 = vector.broadcast %254 : vector<1x64xf32> to vector<2x64xf32>
    %258 = arith.addf %256, %257 : vector<2x64xf32>
    %cst_190 = arith.constant 2.000000e-01 : f32
    %259 = vector.broadcast %cst_190 : f32 to vector<2x64xf32>
    %260 = arith.mulf %259, %258 : vector<2x64xf32>
    %261 = arith.maximumf %258, %260 : vector<2x64xf32>
    %c0_191 = arith.constant 0 : index
    %c0_192 = arith.constant 0 : index
    %c0_193 = arith.constant 0 : index
    %262 = vector.load %arg7[%c0_191, %c0_192, %c0_193] : memref<1x64x16xf32, #tpu.memory_space<vmem>>, vector<1x64x16xf32>
    %263 = vector.shape_cast %262 : vector<1x64x16xf32> to vector<64x16xf32>
    %cst_194 = arith.constant dense<0.000000e+00> : vector<2x16xf32>
    %264 = tpu.matmul %261, %263, %cst_194 {dimension_numbers = #tpu.dot_dimension_numbers<[1], [0], [0], [1], [0, 0, 1, 1], [], []>} : vector<2x64xf32>, vector<64x16xf32>, vector<2x16xf32> -> vector<2x16xf32>
    %c0_195 = arith.constant 0 : index
    %c0_196 = arith.constant 0 : index
    %265 = vector.load %arg8[%c0_195, %c0_196] : memref<1x16xf32, #tpu.memory_space<vmem>>, vector<1x16xf32>
    %266 = vector.broadcast %265 : vector<1x16xf32> to vector<2x16xf32>
    %267 = arith.addf %264, %266 : vector<2x16xf32>
    %268 = vector.extract_strided_slice %267 {offsets = [0, 0], sizes = [2, 8], strides = [1, 1]} : vector<2x16xf32> to vector<2x8xf32>
    %269 = vector.extract_strided_slice %267 {offsets = [0, 8], sizes = [2, 8], strides = [1, 1]} : vector<2x16xf32> to vector<2x8xf32>
    %c0_197 = arith.constant 0 : index
    %c0_198 = arith.constant 0 : index
    %270 = vector.load %arg9[%c0_197, %c0_198] : memref<2x8xf32, #tpu.memory_space<vmem>>, vector<2x8xf32>
    %cst_199 = arith.constant 5.000000e-01 : f32
    %271 = vector.broadcast %cst_199 : f32 to vector<2x8xf32>
    %272 = arith.mulf %269, %271 : vector<2x8xf32>
    %273 = math.exp %272 : vector<2x8xf32>
    %274 = arith.mulf %270, %273 : vector<2x8xf32>
    %275 = arith.addf %268, %274 : vector<2x8xf32>
    %276 = tpu.concatenate %275, %268, %269 in 1 : vector<2x8xf32>, vector<2x8xf32>, vector<2x8xf32> -> vector<2x24xf32>
    %c0_200 = arith.constant 0 : index
    %c0_201 = arith.constant 0 : index
    %277 = vector.load %arg10[%c0_200, %c0_201] : memref<2x24xf32, #tpu.memory_space<vmem>>, vector<2x24xf32>
    tpu.vector_store %arg10[%c0_200, %c0_201], %276 {strides = array<i32>} : memref<2x24xf32, #tpu.memory_space<vmem>>, vector<2x24xf32>,
    return
  }
}

</mosaic_0001>

<llo_original>
// kernel: encoder_forward.1
$region0: #{encoder_forward.1}
  #allocation0 [shape = 'u32[]', space=smem, size = 0x4, offset = 0x4, fixed_abs, tag = 'smem constant byte address 0x4 - core index']
  #allocation1 [shape = 'u32[144,128]{1,0:T(1,128)}', space=vmem, size = 0x12000, scoped, tag = 'internal scratch']
  #allocation2 [shape = 'f32[40,128]{1,0:T(8,128)}', space=vmem, size = 0x5000, scoped, tag = 'scratch operand']
  %s0 = inlined_call_operand.vmem [shape: f32[32,48], index: 0, kind: input, shape index: {}]
  %s1 = inlined_call_operand.vmem [shape: f32[4,48,64], index: 1, kind: input, shape index: {}]
  %s2 = inlined_call_operand.vmem [shape: f32[4,64,64], index: 2, kind: input, shape index: {}]
  %s3 = inlined_call_operand.vmem [shape: f32[4,64,64], index: 3, kind: input, shape index: {}]
  %s4 = inlined_call_operand.vmem [shape: f32[4,64,64], index: 4, kind: input, shape index: {}]
  %s5 = inlined_call_operand.vmem [shape: f32[8,64], index: 5, kind: input, shape index: {}]
  %s6 = inlined_call_operand.vmem [shape: f32[4,64,64], index: 6, kind: input, shape index: {}]
  %s7 = inlined_call_operand.vmem [shape: f32[1,64,16], index: 7, kind: input, shape index: {}]
  %s8 = inlined_call_operand.vmem [shape: f32[1,16], index: 8, kind: input, shape index: {}]
  %s9 = inlined_call_operand.vmem [shape: f32[2,8], index: 9, kind: input, shape index: {}]
  %s10 = inlined_call_operand.vmem [shape: f32[2,24], index: 10, kind: output, shape index: {}]
  %s11 = sld [smem:[#allocation0]]
  $region50: #{encoder_forward.1} parent=0
    _
  %s13 = ssub.s32 1, %s11
  %s14 = scalar_select 0, %s13, %s11
  // Predicated region
  $region2: #{encoder_forward.1} parent=0 // pred_check
    _
  $region3: #{encoder_forward.1} parent=0 // pred_check_branch
    %16 = sbr.rel (0) target = $region5
  $region4: #{encoder_forward.1} parent=0 // pred_region
    _
  $region5: #{encoder_forward.1} parent=0 // pred_fallthru
    _
  // Predicated region
  $region6: #{encoder_forward.1} parent=0 // pred_check
    _
  $region7: #{encoder_forward.1} parent=0 // pred_check_branch
    %18 = sbr.rel (0) target = $region9
  $region8: #{encoder_forward.1} parent=0 // pred_region
    _
  $region9: #{encoder_forward.1} parent=0 // pred_fallthru
    _
  // Predicated region
  $region10: #{encoder_forward.1} parent=0 // pred_check
    _
  $region11: #{encoder_forward.1} parent=0 // pred_check_branch
    %20 = sbr.rel (0) target = $region13
  $region12: #{encoder_forward.1} parent=0 // pred_region
    _
  $region13: #{encoder_forward.1} parent=0 // pred_fallthru
    _
  // Predicated region
  $region14: #{encoder_forward.1} parent=0 // pred_check
    _
  $region15: #{encoder_forward.1} parent=0 // pred_check_branch
    %22 = sbr.rel (0) target = $region17
  $region16: #{encoder_forward.1} parent=0 // pred_region
    _
  $region17: #{encoder_forward.1} parent=0 // pred_fallthru
    _
  // Predicated region
  $region18: #{encoder_forward.1} parent=0 // pred_check
    _
  $region19: #{encoder_forward.1} parent=0 // pred_check_branch
    %24 = sbr.rel (0) target = $region21
  $region20: #{encoder_forward.1} parent=0 // pred_region
    _
  $region21: #{encoder_forward.1} parent=0 // pred_fallthru
    _
  // Predicated region
  $region22: #{encoder_forward.1} parent=0 // pred_check
    _
  $region23: #{encoder_forward.1} parent=0 // pred_check_branch
    %26 = sbr.rel (0) target = $region25
  $region24: #{encoder_forward.1} parent=0 // pred_region
    _
  $region25: #{encoder_forward.1} parent=0 // pred_fallthru
    _
  // Predicated region
  $region26: #{encoder_forward.1} parent=0 // pred_check
    _
  $region27: #{encoder_forward.1} parent=0 // pred_check_branch
    %28 = sbr.rel (0) target = $region29
  $region28: #{encoder_forward.1} parent=0 // pred_region
    _
  $region29: #{encoder_forward.1} parent=0 // pred_fallthru
    _
  // Predicated region
  $region30: #{encoder_forward.1} parent=0 // pred_check
    _
  $region31: #{encoder_forward.1} parent=0 // pred_check_branch
    %30 = sbr.rel (0) target = $region33
  $region32: #{encoder_forward.1} parent=0 // pred_region
    _
  $region33: #{encoder_forward.1} parent=0 // pred_fallthru
    _
  // Predicated region
  $region34: #{encoder_forward.1} parent=0 // pred_check
    _
  $region35: #{encoder_forward.1} parent=0 // pred_check_branch
    %32 = sbr.rel (0) target = $region37
  $region36: #{encoder_forward.1} parent=0 // pred_region
    _
  $region37: #{encoder_forward.1} parent=0 // pred_fallthru
    _
  // Predicated region
  $region38: #{encoder_forward.1} parent=0 // pred_check
    _
  $region39: #{encoder_forward.1} parent=0 // pred_check_branch
    %34 = sbr.rel (0) target = $region41
  $region40: #{encoder_forward.1} parent=0 // pred_region
    _
  $region41: #{encoder_forward.1} parent=0 // pred_fallthru
    _
  %v35 = vld [vmem:[%s0] sm:$0xff]
  %v36 = vld [vmem:[%s0 + $0x8] sm:$0xff]
  %v37 = vld [vmem:[%s0 + $0x10] sm:$0xff]
  %v38 = vld [vmem:[%s0 + $0x18] sm:$0xff]
  %39 = vst [vmem:[#allocation2] sm:$0xff] 0.0
  %40 = vst [vmem:[#allocation2 + $0x8] sm:$0xff] 0.0
  %41 = vst [vmem:[#allocation2 + $0x10] sm:$0xff] 0.0
  %42 = vst [vmem:[#allocation2 + $0x18] sm:$0xff] 0.0
  %43 = vst [vmem:[#allocation2 + $0x20] sm:$0xff] 0.0
  %vm44 = vcmask 392192
  %45 = vst.msk [vmem:[#allocation2 + $0x1] sm:$0xff] %vm44, %v35
  %46 = vst.msk [vmem:[#allocation2 + $0x9] sm:$0xff] %vm44, %v36
  %47 = vst.msk [vmem:[#allocation2 + $0x13] sm:$0xff] %vm44, %v37
  %48 = vst.msk [vmem:[#allocation2 + $0x1b] sm:$0xff] %vm44, %v38
  %v49 = vld [vmem:[#allocation2] ss:$2 sm:$0xff]
  %s50 = scalar_lea.vmem [#allocation2], 18
  %v51 = vld [vmem:[%s50] ss:$2 sm:$0xff]
  %v52 = vld [vmem:[%s1] sm:$0xff]
  %v53 = vld [vmem:[%s1 + $0x8] sm:$0xff]
  %v54 = vld [vmem:[%s1 + $0x10] sm:$0xff]
  %v55 = vld [vmem:[%s1 + $0x18] sm:$0xff]
  %v56 = vld [vmem:[%s1 + $0x20] sm:$0xff]
  %v57 = vld [vmem:[%s1 + $0x28] sm:$0xff]
  %s58 = scalar_lea.vmem [#allocation2], 1
  %v59 = vld [vmem:[%s58] ss:$2 sm:$0xff]
  %s60 = scalar_lea.vmem [#allocation2], 19
  %v61 = vld [vmem:[%s60] ss:$2 sm:$0xff]
  %s62 = scalar_lea.vmem %s1, 48
  %v63 = vld [vmem:[%s62] sm:$0xff]
  %v64 = vld [vmem:[%s62 + $0x8] sm:$0xff]
  %v65 = vld [vmem:[%s62 + $0x10] sm:$0xff]
  %v66 = vld [vmem:[%s62 + $0x18] sm:$0xff]
  %v67 = vld [vmem:[%s62 + $0x20] sm:$0xff]
  %v68 = vld [vmem:[%s62 + $0x28] sm:$0xff]
  %v70 = vsel %vm44, %v59, 0
  %v73 = vsel %vm44, %v61, 0
  %75 = vmatprep.subr.mxu0 0.0
  %76 = vmatpush1.msra.mxu0 %v63
  %77 = vmatprep.subr.mxu0 0.0
  %78 = vmatpush1.msra.mxu0 %v64
  %79 = vmatprep.subr.mxu0 0.0
  %80 = vmatpush1.msra.mxu0 %v65
  %81 = vmatprep.subr.mxu0 0.0
  %82 = vmatpush1.msra.mxu0 %v66
  %83 = vmatprep.subr.mxu0 0.0
  %84 = vmatpush1.msra.mxu0 %v67
  %85 = vmatprep.subr.mxu0 0.0
  %86 = vmatpush1.msra.mxu0 %v68
  %87 = vmatprep.subr.mxu0 0.0
  %88 = vmatpush1.msra.mxu0 0.0
  %89 = vmatprep.subr.mxu0 0.0
  %90 = vmatpush1.msra.mxu0 0.0
  %91 = vmatprep.subr.mxu0 0.0
  %92 = vmatpush1.msra.mxu0 0.0
  %93 = vmatprep.subr.mxu0 0.0
  %94 = vmatpush1.msra.mxu0 0.0
  %95 = vmatprep.subr.mxu0 0.0
  %96 = vmatpush1.msra.mxu0 0.0
  %97 = vmatprep.subr.mxu0 0.0
  %98 = vmatpush1.msra.mxu0 0.0
  %99 = vmatprep.subr.mxu0 0.0
  %100 = vmatpush1.msra.mxu0 0.0
  %101 = vmatprep.subr.mxu0 0.0
  %102 = vmatpush1.msra.mxu0 0.0
  %103 = vmatprep.subr.mxu0 0.0
  %104 = vmatpush1.msra.mxu0 0.0
  %105 = vmatprep.subr.mxu0 0.0
  %106 = vmatpush1.msra.mxu0 0.0
  %107 = vmatprep.subr.mxu0 0.0
  %108 = vmatpush1.msra.mxu0 0.0
  %109 = vmatprep.subr.mxu0 0.0
  %110 = vmatpush1.msra.mxu0 0.0
  %111 = vmatprep.subr.mxu0 0.0
  %112 = vmatpush1.msra.mxu0 0.0
  %113 = vmatprep.subr.mxu0 0.0
  %114 = vmatpush1.msra.mxu0 0.0
  %115 = vmatprep.subr.mxu0 0.0
  %116 = vmatpush1.msra.mxu0 0.0
  %117 = vmatprep.subr.mxu0 0.0
  %118 = vmatpush1.msra.mxu0 0.0
  %119 = vmatprep.subr.mxu0 0.0
  %120 = vmatpush1.msra.mxu0 0.0
  %121 = vmatprep.subr.mxu0 0.0
  %122 = vmatpush1.msra.mxu0 0.0
  %123 = vmatprep.subr.mxu0 0.0
  %124 = vmatpush1.msra.mxu0 0.0
  %125 = vmatprep.subr.mxu0 0.0
  %126 = vmatpush1.msra.mxu0 0.0
  %127 = vmatprep.subr.mxu0 0.0
  %128 = vmatpush1.msra.mxu0 0.0
  %129 = vmatprep.subr.mxu0 0.0
  %130 = vmatpush1.msra.mxu0 0.0
  %131 = vmatprep.subr.mxu0 0.0
  %132 = vmatpush1.msra.mxu0 0.0
  %133 = vmatprep.subr.mxu0 0.0
  %134 = vmatpush1.msra.mxu0 0.0
  %135 = vmatprep.subr.mxu0 0.0
  %136 = vmatpush1.msra.mxu0 0.0
  %137 = vmatprep.subr.mxu0 0.0
  %138 = vmatpush1.msra.mxu0 0.0
  %139 = vmatprep.mubr.f32.mxu0 0.0
  %140 = vmatmul.mubr.f32.gmra.mrb[0].mxu0 %v70
  %v141 = vpop.f32.mrb[0].mxu0
  %v142 = vadd.f32 0.0, %v141
  %v143 = vpop.f32.mrb[0].mxu0
  %144 = vmatprep.mubr.f32.mxu0 0.0
  %145 = vmatmul.mubr.f32.gmra.mrb[0].mxu0 %v73
  %v146 = vpop.f32.mrb[0].mxu0
  %v147 = vadd.f32 0.0, %v146
  %v148 = vpop.f32.mrb[0].mxu0
  %149 = vdwg.mxu0
  %v151 = vsel %vm44, %v49, 0
  %v154 = vsel %vm44, %v51, 0
  %156 = vmatprep.subr.mxu0 0.0
  %157 = vmatpush1.msra.mxu0 %v52
  %158 = vmatprep.subr.mxu0 0.0
  %159 = vmatpush1.msra.mxu0 %v53
  %160 = vmatprep.subr.mxu0 0.0
  %161 = vmatpush1.msra.mxu0 %v54
  %162 = vmatprep.subr.mxu0 0.0
  %163 = vmatpush1.msra.mxu0 %v55
  %164 = vmatprep.subr.mxu0 0.0
  %165 = vmatpush1.msra.mxu0 %v56
  %166 = vmatprep.subr.mxu0 0.0
  %167 = vmatpush1.msra.mxu0 %v57
  %168 = vmatprep.subr.mxu0 0.0
  %169 = vmatpush1.msra.mxu0 0.0
  %170 = vmatprep.subr.mxu0 0.0
  %171 = vmatpush1.msra.mxu0 0.0
  %172 = vmatprep.subr.mxu0 0.0
  %173 = vmatpush1.msra.mxu0 0.0
  %174 = vmatprep.subr.mxu0 0.0
  %175 = vmatpush1.msra.mxu0 0.0
  %176 = vmatprep.subr.mxu0 0.0
  %177 = vmatpush1.msra.mxu0 0.0
  %178 = vmatprep.subr.mxu0 0.0
  %179 = vmatpush1.msra.mxu0 0.0
  %180 = vmatprep.subr.mxu0 0.0
  %181 = vmatpush1.msra.mxu0 0.0
  %182 = vmatprep.subr.mxu0 0.0
  %183 = vmatpush1.msra.mxu0 0.0
  %184 = vmatprep.subr.mxu0 0.0
  %185 = vmatpush1.msra.mxu0 0.0
  %186 = vmatprep.subr.mxu0 0.0
  %187 = vmatpush1.msra.mxu0 0.0
  %188 = vmatprep.subr.mxu0 0.0
  %189 = vmatpush1.msra.mxu0 0.0
  %190 = vmatprep.subr.mxu0 0.0
  %191 = vmatpush1.msra.mxu0 0.0
  %192 = vmatprep.subr.mxu0 0.0
  %193 = vmatpush1.msra.mxu0 0.0
  %194 = vmatprep.subr.mxu0 0.0
  %195 = vmatpush1.msra.mxu0 0.0
  %196 = vmatprep.subr.mxu0 0.0
  %197 = vmatpush1.msra.mxu0 0.0
  %198 = vmatprep.subr.mxu0 0.0
  %199 = vmatpush1.msra.mxu0 0.0
  %200 = vmatprep.subr.mxu0 0.0
  %201 = vmatpush1.msra.mxu0 0.0
  %202 = vmatprep.subr.mxu0 0.0
  %203 = vmatpush1.msra.mxu0 0.0
  %204 = vmatprep.subr.mxu0 0.0
  %205 = vmatpush1.msra.mxu0 0.0
  %206 = vmatprep.subr.mxu0 0.0
  %207 = vmatpush1.msra.mxu0 0.0
  %208 = vmatprep.subr.mxu0 0.0
  %209 = vmatpush1.msra.mxu0 0.0
  %210 = vmatprep.subr.mxu0 0.0
  %211 = vmatpush1.msra.mxu0 0.0
  %212 = vmatprep.subr.mxu0 0.0
  %213 = vmatpush1.msra.mxu0 0.0
  %214 = vmatprep.subr.mxu0 0.0
  %215 = vmatpush1.msra.mxu0 0.0
  %216 = vmatprep.subr.mxu0 0.0
  %217 = vmatpush1.msra.mxu0 0.0
  %218 = vmatprep.subr.mxu0 0.0
  %219 = vmatpush1.msra.mxu0 0.0
  %220 = vmatprep.mubr.f32.mxu0 0.0
  %221 = vmatmul.mubr.f32.gmra.mrb[0].mxu0 %v151
  %v222 = vpop.f32.mrb[0].mxu0
  %v223 = vadd.f32 %v142, %v222
  %v224 = vpop.f32.mrb[0].mxu0
  %225 = vmatprep.mubr.f32.mxu0 0.0
  %226 = vmatmul.mubr.f32.gmra.mrb[0].mxu0 %v154
  %v227 = vpop.f32.mrb[0].mxu0
  %v228 = vadd.f32 %v147, %v227
  %v229 = vpop.f32.mrb[0].mxu0
  %230 = vdwg.mxu0
  %s231 = scalar_lea.vmem [#allocation2], 2
  %v232 = vld [vmem:[%s231] ss:$2 sm:$0xff]
  %s233 = scalar_lea.vmem [#allocation2], 20
  %v234 = vld [vmem:[%s233] ss:$2 sm:$0xff]
  %s235 = scalar_lea.vmem %s1, 96
  %v236 = vld [vmem:[%s235] sm:$0xff]
  %v237 = vld [vmem:[%s235 + $0x8] sm:$0xff]
  %v238 = vld [vmem:[%s235 + $0x10] sm:$0xff]
  %v239 = vld [vmem:[%s235 + $0x18] sm:$0xff]
  %v240 = vld [vmem:[%s235 + $0x20] sm:$0xff]
  %v241 = vld [vmem:[%s235 + $0x28] sm:$0xff]
  %v243 = vsel %vm44, %v232, 0
  %v246 = vsel %vm44, %v234, 0
  %248 = vmatprep.subr.mxu0 0.0
  %249 = vmatpush1.msra.mxu0 %v236
  %250 = vmatprep.subr.mxu0 0.0
  %251 = vmatpush1.msra.mxu0 %v237
  %252 = vmatprep.subr.mxu0 0.0
  %253 = vmatpush1.msra.mxu0 %v238
  %254 = vmatprep.subr.mxu0 0.0
  %255 = vmatpush1.msra.mxu0 %v239
  %256 = vmatprep.subr.mxu0 0.0
  %257 = vmatpush1.msra.mxu0 %v240
  %258 = vmatprep.subr.mxu0 0.0
  %259 = vmatpush1.msra.mxu0 %v241
  %260 = vmatprep.subr.mxu0 0.0
  %261 = vmatpush1.msra.mxu0 0.0
  %262 = vmatprep.subr.mxu0 0.0
  %263 = vmatpush1.msra.mxu0 0.0
  %264 = vmatprep.subr.mxu0 0.0
  %265 = vmatpush1.msra.mxu0 0.0
  %266 = vmatprep.subr.mxu0 0.0
  %267 = vmatpush1.msra.mxu0 0.0
  %268 = vmatprep.subr.mxu0 0.0
  %269 = vmatpush1.msra.mxu0 0.0
  %270 = vmatprep.subr.mxu0 0.0
  %271 = vmatpush1.msra.mxu0 0.0
  %272 = vmatprep.subr.mxu0 0.0
  %273 = vmatpush1.msra.mxu0 0.0
  %274 = vmatprep.subr.mxu0 0.0
  %275 = vmatpush1.msra.mxu0 0.0
  %276 = vmatprep.subr.mxu0 0.0
  %277 = vmatpush1.msra.mxu0 0.0
  %278 = vmatprep.subr.mxu0 0.0
  %279 = vmatpush1.msra.mxu0 0.0
  %280 = vmatprep.subr.mxu0 0.0
  %281 = vmatpush1.msra.mxu0 0.0
  %282 = vmatprep.subr.mxu0 0.0
  %283 = vmatpush1.msra.mxu0 0.0
  %284 = vmatprep.subr.mxu0 0.0
  %285 = vmatpush1.msra.mxu0 0.0
  %286 = vmatprep.subr.mxu0 0.0
  %287 = vmatpush1.msra.mxu0 0.0
  %288 = vmatprep.subr.mxu0 0.0
  %289 = vmatpush1.msra.mxu0 0.0
  %290 = vmatprep.subr.mxu0 0.0
  %291 = vmatpush1.msra.mxu0 0.0
  %292 = vmatprep.subr.mxu0 0.0
  %293 = vmatpush1.msra.mxu0 0.0
  %294 = vmatprep.subr.mxu0 0.0
  %295 = vmatpush1.msra.mxu0 0.0
  %296 = vmatprep.subr.mxu0 0.0
  %297 = vmatpush1.msra.mxu0 0.0
  %298 = vmatprep.subr.mxu0 0.0
  %299 = vmatpush1.msra.mxu0 0.0
  %300 = vmatprep.subr.mxu0 0.0
  %301 = vmatpush1.msra.mxu0 0.0
  %302 = vmatprep.subr.mxu0 0.0
  %303 = vmatpush1.msra.mxu0 0.0
  %304 = vmatprep.subr.mxu0 0.0
  %305 = vmatpush1.msra.mxu0 0.0
  %306 = vmatprep.subr.mxu0 0.0
  %307 = vmatpush1.msra.mxu0 0.0
  %308 = vmatprep.subr.mxu0 0.0
  %309 = vmatpush1.msra.mxu0 0.0
  %310 = vmatprep.subr.mxu0 0.0
  %311 = vmatpush1.msra.mxu0 0.0
  %312 = vmatprep.mubr.f32.mxu0 0.0
  %313 = vmatmul.mubr.f32.gmra.mrb[0].mxu0 %v243
  %v314 = vpop.f32.mrb[0].mxu0
  %v315 = vadd.f32 0.0, %v314
  %v316 = vpop.f32.mrb[0].mxu0
  %317 = vmatprep.mubr.f32.mxu0 0.0
  %318 = vmatmul.mubr.f32.gmra.mrb[0].mxu0 %v246
  %v319 = vpop.f32.mrb[0].mxu0
  %v320 = vadd.f32 0.0, %v319
  %v321 = vpop.f32.mrb[0].mxu0
  %322 = vdwg.mxu0
  %v323 = vadd.f32 %v223, %v315
  %v324 = vadd.f32 %v228, %v320
  %s325 = scalar_lea.vmem [#allocation2], 3
  %v326 = vld [vmem:[%s325] ss:$2 sm:$0xff]
  %s327 = scalar_lea.vmem [#allocation2], 21
  %v328 = vld [vmem:[%s327] ss:$2 sm:$0xff]
  %s329 = scalar_lea.vmem %s1, 144
  %v330 = vld [vmem:[%s329] sm:$0xff]
  %v331 = vld [vmem:[%s329 + $0x8] sm:$0xff]
  %v332 = vld [vmem:[%s329 + $0x10] sm:$0xff]
  %v333 = vld [vmem:[%s329 + $0x18] sm:$0xff]
  %v334 = vld [vmem:[%s329 + $0x20] sm:$0xff]
  %v335 = vld [vmem:[%s329 + $0x28] sm:$0xff]
  %v337 = vsel %vm44, %v326, 0
  %v340 = vsel %vm44, %v328, 0
  %342 = vmatprep.subr.mxu0 0.0
  %343 = vmatpush1.msra.mxu0 %v330
  %344 = vmatprep.subr.mxu0 0.0
  %345 = vmatpush1.msra.mxu0 %v331
  %346 = vmatprep.subr.mxu0 0.0
  %347 = vmatpush1.msra.mxu0 %v332
  %348 = vmatprep.subr.mxu0 0.0
  %349 = vmatpush1.msra.mxu0 %v333
  %350 = vmatprep.subr.mxu0 0.0
  %351 = vmatpush1.msra.mxu0 %v334
  %352 = vmatprep.subr.mxu0 0.0
  %353 = vmatpush1.msra.mxu0 %v335
  %354 = vmatprep.subr.mxu0 0.0
  %355 = vmatpush1.msra.mxu0 0.0
  %356 = vmatprep.subr.mxu0 0.0
  %357 = vmatpush1.msra.mxu0 0.0
  %358 = vmatprep.subr.mxu0 0.0
  %359 = vmatpush1.msra.mxu0 0.0
  %360 = vmatprep.subr.mxu0 0.0
  %361 = vmatpush1.msra.mxu0 0.0
  %362 = vmatprep.subr.mxu0 0.0
  %363 = vmatpush1.msra.mxu0 0.0
  %364 = vmatprep.subr.mxu0 0.0
  %365 = vmatpush1.msra.mxu0 0.0
  %366 = vmatprep.subr.mxu0 0.0
  %367 = vmatpush1.msra.mxu0 0.0
  %368 = vmatprep.subr.mxu0 0.0
  %369 = vmatpush1.msra.mxu0 0.0
  %370 = vmatprep.subr.mxu0 0.0
  %371 = vmatpush1.msra.mxu0 0.0
  %372 = vmatprep.subr.mxu0 0.0
  %373 = vmatpush1.msra.mxu0 0.0
  %374 = vmatprep.subr.mxu0 0.0
  %375 = vmatpush1.msra.mxu0 0.0
  %376 = vmatprep.subr.mxu0 0.0
  %377 = vmatpush1.msra.mxu0 0.0
  %378 = vmatprep.subr.mxu0 0.0
  %379 = vmatpush1.msra.mxu0 0.0
  %380 = vmatprep.subr.mxu0 0.0
  %381 = vmatpush1.msra.mxu0 0.0
  %382 = vmatprep.subr.mxu0 0.0
  %383 = vmatpush1.msra.mxu0 0.0
  %384 = vmatprep.subr.mxu0 0.0
  %385 = vmatpush1.msra.mxu0 0.0
  %386 = vmatprep.subr.mxu0 0.0
  %387 = vmatpush1.msra.mxu0 0.0
  %388 = vmatprep.subr.mxu0 0.0
  %389 = vmatpush1.msra.mxu0 0.0
  %390 = vmatprep.subr.mxu0 0.0
  %391 = vmatpush1.msra.mxu0 0.0
  %392 = vmatprep.subr.mxu0 0.0
  %393 = vmatpush1.msra.mxu0 0.0
  %394 = vmatprep.subr.mxu0 0.0
  %395 = vmatpush1.msra.mxu0 0.0
  %396 = vmatprep.subr.mxu0 0.0
  %397 = vmatpush1.msra.mxu0 0.0
  %398 = vmatprep.subr.mxu0 0.0
  %399 = vmatpush1.msra.mxu0 0.0
  %400 = vmatprep.subr.mxu0 0.0
  %401 = vmatpush1.msra.mxu0 0.0
  %402 = vmatprep.subr.mxu0 0.0
  %403 = vmatpush1.msra.mxu0 0.0
  %404 = vmatprep.subr.mxu0 0.0
  %405 = vmatpush1.msra.mxu0 0.0
  %406 = vmatprep.mubr.f32.mxu0 0.0
  %407 = vmatmul.mubr.f32.gmra.mrb[0].mxu0 %v337
  %v408 = vpop.f32.mrb[0].mxu0
  %v409 = vadd.f32 0.0, %v408
  %v410 = vpop.f32.mrb[0].mxu0
  %411 = vmatprep.mubr.f32.mxu0 0.0
  %412 = vmatmul.mubr.f32.gmra.mrb[0].mxu0 %v340
  %v413 = vpop.f32.mrb[0].mxu0
  %v414 = vadd.f32 0.0, %v413
  %v415 = vpop.f32.mrb[0].mxu0
  %416 = vdwg.mxu0
  %v417 = vadd.f32 %v323, %v409
  %v418 = vadd.f32 %v324, %v414
  %vm419 = vcmask 523264
  %v420 = vsel %vm419, %v417, 0.0
  %v421 = vsel %vm419, %v418, 0.0
  %v422 = vadd.f32 %v420, %v421
  %v423 = vrot.slane %v422, 4
  %v424 = vadd.f32 %v422, %v423
  %v425 = vrot.slane %v424, 2
  %v426 = vadd.f32 %v424, %v425
  %v427 = vrot.slane %v426, 1
  %v428 = vadd.f32 %v426, %v427
  %v429 = vmul.f32 %v417, %v417
  %v430 = vmul.f32 %v418, %v418
  %v431 = vsel %vm419, %v429, 0.0
  %v432 = vsel %vm419, %v430, 0.0
  %v433 = vadd.f32 %v431, %v432
  %v434 = vrot.slane %v433, 4
  %v435 = vadd.f32 %v433, %v434
  %v436 = vrot.slane %v435, 2
  %v437 = vadd.f32 %v435, %v436
  %v438 = vrot.slane %v437, 1
  %v439 = vadd.f32 %v437, %v438
  %vm440 = vcmask 1040384
  %v441 = vsel %vm440, %v428, %v439
  %v442 = vld [vmem:[%s6] sm:$0xff]
  %v443 = vld [vmem:[%s6 + $0x8] sm:$0xff]
  %v444 = vld [vmem:[%s6 + $0x10] sm:$0xff]
  %v445 = vld [vmem:[%s6 + $0x18] sm:$0xff]
  %v446 = vld [vmem:[%s6 + $0x20] sm:$0xff]
  %v447 = vld [vmem:[%s6 + $0x28] sm:$0xff]
  %v448 = vld [vmem:[%s6 + $0x30] sm:$0xff]
  %v449 = vld [vmem:[%s6 + $0x38] sm:$0xff]
  %v451 = vsel %vm419, %v441, 0
  %453 = vmatprep.subr.mxu0 0.0
  %454 = vmatpush1.msra.mxu0 %v442
  %455 = vmatprep.subr.mxu0 0.0
  %456 = vmatpush1.msra.mxu0 %v443
  %457 = vmatprep.subr.mxu0 0.0
  %458 = vmatpush1.msra.mxu0 %v444
  %459 = vmatprep.subr.mxu0 0.0
  %460 = vmatpush1.msra.mxu0 %v445
  %461 = vmatprep.subr.mxu0 0.0
  %462 = vmatpush1.msra.mxu0 %v446
  %463 = vmatprep.subr.mxu0 0.0
  %464 = vmatpush1.msra.mxu0 %v447
  %465 = vmatprep.subr.mxu0 0.0
  %466 = vmatpush1.msra.mxu0 %v448
  %467 = vmatprep.subr.mxu0 0.0
  %468 = vmatpush1.msra.mxu0 %v449
  %469 = vmatprep.subr.mxu0 0.0
  %470 = vmatpush1.msra.mxu0 0.0
  %471 = vmatprep.subr.mxu0 0.0
  %472 = vmatpush1.msra.mxu0 0.0
  %473 = vmatprep.subr.mxu0 0.0
  %474 = vmatpush1.msra.mxu0 0.0
  %475 = vmatprep.subr.mxu0 0.0
  %476 = vmatpush1.msra.mxu0 0.0
  %477 = vmatprep.subr.mxu0 0.0
  %478 = vmatpush1.msra.mxu0 0.0
  %479 = vmatprep.subr.mxu0 0.0
  %480 = vmatpush1.msra.mxu0 0.0
  %481 = vmatprep.subr.mxu0 0.0
  %482 = vmatpush1.msra.mxu0 0.0
  %483 = vmatprep.subr.mxu0 0.0
  %484 = vmatpush1.msra.mxu0 0.0
  %485 = vmatprep.subr.mxu0 0.0
  %486 = vmatpush1.msra.mxu0 0.0
  %487 = vmatprep.subr.mxu0 0.0
  %488 = vmatpush1.msra.mxu0 0.0
  %489 = vmatprep.subr.mxu0 0.0
  %490 = vmatpush1.msra.mxu0 0.0
  %491 = vmatprep.subr.mxu0 0.0
  %492 = vmatpush1.msra.mxu0 0.0
  %493 = vmatprep.subr.mxu0 0.0
  %494 = vmatpush1.msra.mxu0 0.0
  %495 = vmatprep.subr.mxu0 0.0
  %496 = vmatpush1.msra.mxu0 0.0
  %497 = vmatprep.subr.mxu0 0.0
  %498 = vmatpush1.msra.mxu0 0.0
  %499 = vmatprep.subr.mxu0 0.0
  %500 = vmatpush1.msra.mxu0 0.0
  %501 = vmatprep.subr.mxu0 0.0
  %502 = vmatpush1.msra.mxu0 0.0
  %503 = vmatprep.subr.mxu0 0.0
  %504 = vmatpush1.msra.mxu0 0.0
  %505 = vmatprep.subr.mxu0 0.0
  %506 = vmatpush1.msra.mxu0 0.0
  %507 = vmatprep.subr.mxu0 0.0
  %508 = vmatpush1.msra.mxu0 0.0
  %509 = vmatprep.subr.mxu0 0.0
  %510 = vmatpush1.msra.mxu0 0.0
  %511 = vmatprep.subr.mxu0 0.0
  %512 = vmatpush1.msra.mxu0 0.0
  %513 = vmatprep.subr.mxu0 0.0
  %514 = vmatpush1.msra.mxu0 0.0
  %515 = vmatprep.subr.mxu0 0.0
  %516 = vmatpush1.msra.mxu0 0.0
  %517 = vmatprep.mubr.f32.mxu0 0.0
  %518 = vmatmul.mubr.f32.gmra.mrb[0].mxu0 %v451
  %v519 = vpop.f32.mrb[0].mxu0
  %v520 = vadd.f32 0.0, %v519
  %v521 = vpop.f32.mrb[0].mxu0
  %522 = vdwg.mxu0
  %v523 = vmul.f32 %v520, 0.0078125
  %v524 = vmul.f32 %v523, %v523
  %v526 = vrot.slane %v524, 7
  %v528 = vsub.f32 %v523, %v526
  %v529 = vld [vmem:[%s5] sm:$0x1]
  %v530 = vld [vmem:[%s5 + $0x1] sm:$0x1]
  %v531 = vadd.f32 %v528, 1e-05
  %v532 = vrsqrt.pop %v531
  %v534 = vrot.slane %v532, 1
  %v536 = vmul.f32 %v529, %v534
  %v537 = vmul.f32 %v523, %v536
  %v538 = vsub.f32 %v530, %v537
  %540 = vrot.lane.b32.xlu0 %v536, 8
  %v541 = vpop.permute.xlu0 %540
  %543 = vrot.lane.b32.xlu0 %v536, 16
  %v544 = vpop.permute.xlu0 %543
  %546 = vrot.lane.b32.xlu0 %v536, 24
  %v547 = vpop.permute.xlu0 %546
  %549 = vrot.lane.b32.xlu0 %v536, 32
  %v550 = vpop.permute.xlu0 %549
  %552 = vrot.lane.b32.xlu0 %v536, 40
  %v553 = vpop.permute.xlu0 %552
  %555 = vrot.lane.b32.xlu0 %v536, 48
  %v556 = vpop.permute.xlu0 %555
  %558 = vrot.lane.b32.xlu0 %v536, 56
  %v559 = vpop.permute.xlu0 %558
  %vm561 = vcmask 64512
  %v562 = vsel %vm561, %v536, %v541
  %vm563 = vcmask 130048
  %v564 = vsel %vm563, %v562, %v544
  %vm565 = vcmask 195584
  %v566 = vsel %vm565, %v564, %v547
  %vm567 = vcmask 261120
  %v568 = vsel %vm567, %v566, %v550
  %vm569 = vcmask 326656
  %v570 = vsel %vm569, %v568, %v553
  %v571 = vsel %vm44, %v570, %v556
  %vm572 = vcmask 457728
  %v573 = vsel %vm572, %v571, %v559
  %575 = vrot.lane.b32.xlu0 %v538, 8
  %v576 = vpop.permute.xlu0 %575
  %578 = vrot.lane.b32.xlu0 %v538, 16
  %v579 = vpop.permute.xlu0 %578
  %581 = vrot.lane.b32.xlu0 %v538, 24
  %v582 = vpop.permute.xlu0 %581
  %584 = vrot.lane.b32.xlu0 %v538, 32
  %v585 = vpop.permute.xlu0 %584
  %587 = vrot.lane.b32.xlu0 %v538, 40
  %v588 = vpop.permute.xlu0 %587
  %590 = vrot.lane.b32.xlu0 %v538, 48
  %v591 = vpop.permute.xlu0 %590
  %593 = vrot.lane.b32.xlu0 %v538, 56
  %v594 = vpop.permute.xlu0 %593
  %v596 = vsel %vm561, %v538, %v576
  %v597 = vsel %vm563, %v596, %v579
  %v598 = vsel %vm565, %v597, %v582
  %v599 = vsel %vm567, %v598, %v585
  %v600 = vsel %vm569, %v599, %v588
  %v601 = vsel %vm44, %v600, %v591
  %v602 = vsel %vm572, %v601, %v594
  %v603 = vlaneseq
  %v604 = vshrl.u32 %v603, 7
  %v605 = vsub.s32 0, %v604
  %v606 = vrot.slane %v573, %v605
  %v607 = vmul.f32 %v417, %v606
  %v608 = vmul.f32 %v418, %v606
  %v609 = vlaneseq
  %v610 = vshrl.u32 %v609, 7
  %v611 = vsub.s32 0, %v610
  %v612 = vrot.slane %v602, %v611
  %v613 = vadd.f32 %v607, %v612
  %v614 = vadd.f32 %v608, %v612
  %v615 = vmul.f32 %v613, 0.2
  %v616 = vmul.f32 %v614, 0.2
  %v617 = vmax.f32 %v613, %v615
  %v618 = vmax.f32 %v614, %v616
  %619 = vst [vmem:[#allocation2] sm:$0xff] 0.0
  %620 = vst [vmem:[#allocation2 + $0x8] sm:$0xff] 0.0
  %621 = vst [vmem:[#allocation2 + $0x10] sm:$0xff] 0.0
  %622 = vst [vmem:[#allocation2 + $0x18] sm:$0xff] 0.0
  %623 = vst [vmem:[#allocation2 + $0x20] sm:$0xff] 0.0
  %624 = vst.msk [vmem:[#allocation2 + $0x1] sm:$0xff] %vm419, %v617
  %625 = vst.msk [vmem:[#allocation2 + $0xb] sm:$0xff] %vm419, %v618
  %v626 = vld [vmem:[#allocation2] ss:$2 sm:$0xf]
  %s627 = scalar_lea.vmem [#allocation2], 10
  %v628 = vld [vmem:[%s627] ss:$2 sm:$0xf]
  %v630 = vrot.slane %v628, 4
  %vm632 = vcmask 1043456
  %v633 = vsel %vm632, %v626, %v630
  %v634 = vld [vmem:[%s2] sm:$0xff]
  %v635 = vld [vmem:[%s2 + $0x8] sm:$0xff]
  %v636 = vld [vmem:[%s2 + $0x10] sm:$0xff]
  %v637 = vld [vmem:[%s2 + $0x18] sm:$0xff]
  %v638 = vld [vmem:[%s2 + $0x20] sm:$0xff]
  %v639 = vld [vmem:[%s2 + $0x28] sm:$0xff]
  %v640 = vld [vmem:[%s2 + $0x30] sm:$0xff]
  %v641 = vld [vmem:[%s2 + $0x38] sm:$0xff]
  %v642 = vld [vmem:[%s58] ss:$2 sm:$0xf]
  %s643 = scalar_lea.vmem [#allocation2], 11
  %v644 = vld [vmem:[%s643] ss:$2 sm:$0xf]
  %v646 = vrot.slane %v644, 4
  %v648 = vsel %vm632, %v642, %v646
  %s649 = scalar_lea.vmem %s2, 64
  %v650 = vld [vmem:[%s649] sm:$0xff]
  %v651 = vld [vmem:[%s649 + $0x8] sm:$0xff]
  %v652 = vld [vmem:[%s649 + $0x10] sm:$0xff]
  %v653 = vld [vmem:[%s649 + $0x18] sm:$0xff]
  %v654 = vld [vmem:[%s649 + $0x20] sm:$0xff]
  %v655 = vld [vmem:[%s649 + $0x28] sm:$0xff]
  %v656 = vld [vmem:[%s649 + $0x30] sm:$0xff]
  %v657 = vld [vmem:[%s649 + $0x38] sm:$0xff]
  %v659 = vsel %vm419, %v648, 0
  %661 = vmatprep.subr.mxu0 0.0
  %662 = vmatpush1.msra.mxu0 %v650
  %663 = vmatprep.subr.mxu0 0.0
  %664 = vmatpush1.msra.mxu0 %v651
  %665 = vmatprep.subr.mxu0 0.0
  %666 = vmatpush1.msra.mxu0 %v652
  %667 = vmatprep.subr.mxu0 0.0
  %668 = vmatpush1.msra.mxu0 %v653
  %669 = vmatprep.subr.mxu0 0.0
  %670 = vmatpush1.msra.mxu0 %v654
  %671 = vmatprep.subr.mxu0 0.0
  %672 = vmatpush1.msra.mxu0 %v655
  %673 = vmatprep.subr.mxu0 0.0
  %674 = vmatpush1.msra.mxu0 %v656
  %675 = vmatprep.subr.mxu0 0.0
  %676 = vmatpush1.msra.mxu0 %v657
  %677 = vmatprep.subr.mxu0 0.0
  %678 = vmatpush1.msra.mxu0 0.0
  %679 = vmatprep.subr.mxu0 0.0
  %680 = vmatpush1.msra.mxu0 0.0
  %681 = vmatprep.subr.mxu0 0.0
  %682 = vmatpush1.msra.mxu0 0.0
  %683 = vmatprep.subr.mxu0 0.0
  %684 = vmatpush1.msra.mxu0 0.0
  %685 = vmatprep.subr.mxu0 0.0
  %686 = vmatpush1.msra.mxu0 0.0
  %687 = vmatprep.subr.mxu0 0.0
  %688 = vmatpush1.msra.mxu0 0.0
  %689 = vmatprep.subr.mxu0 0.0
  %690 = vmatpush1.msra.mxu0 0.0
  %691 = vmatprep.subr.mxu0 0.0
  %692 = vmatpush1.msra.mxu0 0.0
  %693 = vmatprep.subr.mxu0 0.0
  %694 = vmatpush1.msra.mxu0 0.0
  %695 = vmatprep.subr.mxu0 0.0
  %696 = vmatpush1.msra.mxu0 0.0
  %697 = vmatprep.subr.mxu0 0.0
  %698 = vmatpush1.msra.mxu0 0.0
  %699 = vmatprep.subr.mxu0 0.0
  %700 = vmatpush1.msra.mxu0 0.0
  %701 = vmatprep.subr.mxu0 0.0
  %702 = vmatpush1.msra.mxu0 0.0
  %703 = vmatprep.subr.mxu0 0.0
  %704 = vmatpush1.msra.mxu0 0.0
  %705 = vmatprep.subr.mxu0 0.0
  %706 = vmatpush1.msra.mxu0 0.0
  %707 = vmatprep.subr.mxu0 0.0
  %708 = vmatpush1.msra.mxu0 0.0
  %709 = vmatprep.subr.mxu0 0.0
  %710 = vmatpush1.msra.mxu0 0.0
  %711 = vmatprep.subr.mxu0 0.0
  %712 = vmatpush1.msra.mxu0 0.0
  %713 = vmatprep.subr.mxu0 0.0
  %714 = vmatpush1.msra.mxu0 0.0
  %715 = vmatprep.subr.mxu0 0.0
  %716 = vmatpush1.msra.mxu0 0.0
  %717 = vmatprep.subr.mxu0 0.0
  %718 = vmatpush1.msra.mxu0 0.0
  %719 = vmatprep.subr.mxu0 0.0
  %720 = vmatpush1.msra.mxu0 0.0
  %721 = vmatprep.subr.mxu0 0.0
  %722 = vmatpush1.msra.mxu0 0.0
  %723 = vmatprep.subr.mxu0 0.0
  %724 = vmatpush1.msra.mxu0 0.0
  %725 = vmatprep.mubr.f32.mxu0 0.0
  %726 = vmatmul.mubr.f32.gmra.mrb[0].mxu0 %v659
  %v727 = vpop.f32.mrb[0].mxu0
  %v728 = vadd.f32 0.0, %v727
  %v729 = vpop.f32.mrb[0].mxu0
  %730 = vdwg.mxu0
  %v732 = vsel %vm419, %v633, 0
  %734 = vmatprep.subr.mxu0 0.0
  %735 = vmatpush1.msra.mxu0 %v634
  %736 = vmatprep.subr.mxu0 0.0
  %737 = vmatpush1.msra.mxu0 %v635
  %738 = vmatprep.subr.mxu0 0.0
  %739 = vmatpush1.msra.mxu0 %v636
  %740 = vmatprep.subr.mxu0 0.0
  %741 = vmatpush1.msra.mxu0 %v637
  %742 = vmatprep.subr.mxu0 0.0
  %743 = vmatpush1.msra.mxu0 %v638
  %744 = vmatprep.subr.mxu0 0.0
  %745 = vmatpush1.msra.mxu0 %v639
  %746 = vmatprep.subr.mxu0 0.0
  %747 = vmatpush1.msra.mxu0 %v640
  %748 = vmatprep.subr.mxu0 0.0
  %749 = vmatpush1.msra.mxu0 %v641
  %750 = vmatprep.subr.mxu0 0.0
  %751 = vmatpush1.msra.mxu0 0.0
  %752 = vmatprep.subr.mxu0 0.0
  %753 = vmatpush1.msra.mxu0 0.0
  %754 = vmatprep.subr.mxu0 0.0
  %755 = vmatpush1.msra.mxu0 0.0
  %756 = vmatprep.subr.mxu0 0.0
  %757 = vmatpush1.msra.mxu0 0.0
  %758 = vmatprep.subr.mxu0 0.0
  %759 = vmatpush1.msra.mxu0 0.0
  %760 = vmatprep.subr.mxu0 0.0
  %761 = vmatpush1.msra.mxu0 0.0
  %762 = vmatprep.subr.mxu0 0.0
  %763 = vmatpush1.msra.mxu0 0.0
  %764 = vmatprep.subr.mxu0 0.0
  %765 = vmatpush1.msra.mxu0 0.0
  %766 = vmatprep.subr.mxu0 0.0
  %767 = vmatpush1.msra.mxu0 0.0
  %768 = vmatprep.subr.mxu0 0.0
  %769 = vmatpush1.msra.mxu0 0.0
  %770 = vmatprep.subr.mxu0 0.0
  %771 = vmatpush1.msra.mxu0 0.0
  %772 = vmatprep.subr.mxu0 0.0
  %773 = vmatpush1.msra.mxu0 0.0
  %774 = vmatprep.subr.mxu0 0.0
  %775 = vmatpush1.msra.mxu0 0.0
  %776 = vmatprep.subr.mxu0 0.0
  %777 = vmatpush1.msra.mxu0 0.0
  %778 = vmatprep.subr.mxu0 0.0
  %779 = vmatpush1.msra.mxu0 0.0
  %780 = vmatprep.subr.mxu0 0.0
  %781 = vmatpush1.msra.mxu0 0.0
  %782 = vmatprep.subr.mxu0 0.0
  %783 = vmatpush1.msra.mxu0 0.0
  %784 = vmatprep.subr.mxu0 0.0
  %785 = vmatpush1.msra.mxu0 0.0
  %786 = vmatprep.subr.mxu0 0.0
  %787 = vmatpush1.msra.mxu0 0.0
  %788 = vmatprep.subr.mxu0 0.0
  %789 = vmatpush1.msra.mxu0 0.0
  %790 = vmatprep.subr.mxu0 0.0
  %791 = vmatpush1.msra.mxu0 0.0
  %792 = vmatprep.subr.mxu0 0.0
  %793 = vmatpush1.msra.mxu0 0.0
  %794 = vmatprep.subr.mxu0 0.0
  %795 = vmatpush1.msra.mxu0 0.0
  %796 = vmatprep.subr.mxu0 0.0
  %797 = vmatpush1.msra.mxu0 0.0
  %798 = vmatprep.mubr.f32.mxu0 0.0
  %799 = vmatmul.mubr.f32.gmra.mrb[0].mxu0 %v732
  %v800 = vpop.f32.mrb[0].mxu0
  %v801 = vadd.f32 %v728, %v800
  %v802 = vpop.f32.mrb[0].mxu0
  %803 = vdwg.mxu0
  %v804 = vld [vmem:[%s231] ss:$2 sm:$0xf]
  %s805 = scalar_lea.vmem [#allocation2], 12
  %v806 = vld [vmem:[%s805] ss:$2 sm:$0xf]
  %v808 = vrot.slane %v806, 4
  %v810 = vsel %vm632, %v804, %v808
  %s811 = scalar_lea.vmem %s2, 128
  %v812 = vld [vmem:[%s811] sm:$0xff]
  %v813 = vld [vmem:[%s811 + $0x8] sm:$0xff]
  %v814 = vld [vmem:[%s811 + $0x10] sm:$0xff]
  %v815 = vld [vmem:[%s811 + $0x18] sm:$0xff]
  %v816 = vld [vmem:[%s811 + $0x20] sm:$0xff]
  %v817 = vld [vmem:[%s811 + $0x28] sm:$0xff]
  %v818 = vld [vmem:[%s811 + $0x30] sm:$0xff]
  %v819 = vld [vmem:[%s811 + $0x38] sm:$0xff]
  %v821 = vsel %vm419, %v810, 0
  %823 = vmatprep.subr.mxu0 0.0
  %824 = vmatpush1.msra.mxu0 %v812
  %825 = vmatprep.subr.mxu0 0.0
  %826 = vmatpush1.msra.mxu0 %v813
  %827 = vmatprep.subr.mxu0 0.0
  %828 = vmatpush1.msra.mxu0 %v814
  %829 = vmatprep.subr.mxu0 0.0
  %830 = vmatpush1.msra.mxu0 %v815
  %831 = vmatprep.subr.mxu0 0.0
  %832 = vmatpush1.msra.mxu0 %v816
  %833 = vmatprep.subr.mxu0 0.0
  %834 = vmatpush1.msra.mxu0 %v817
  %835 = vmatprep.subr.mxu0 0.0
  %836 = vmatpush1.msra.mxu0 %v818
  %837 = vmatprep.subr.mxu0 0.0
  %838 = vmatpush1.msra.mxu0 %v819
  %839 = vmatprep.subr.mxu0 0.0
  %840 = vmatpush1.msra.mxu0 0.0
  %841 = vmatprep.subr.mxu0 0.0
  %842 = vmatpush1.msra.mxu0 0.0
  %843 = vmatprep.subr.mxu0 0.0
  %844 = vmatpush1.msra.mxu0 0.0
  %845 = vmatprep.subr.mxu0 0.0
  %846 = vmatpush1.msra.mxu0 0.0
  %847 = vmatprep.subr.mxu0 0.0
  %848 = vmatpush1.msra.mxu0 0.0
  %849 = vmatprep.subr.mxu0 0.0
  %850 = vmatpush1.msra.mxu0 0.0
  %851 = vmatprep.subr.mxu0 0.0
  %852 = vmatpush1.msra.mxu0 0.0
  %853 = vmatprep.subr.mxu0 0.0
  %854 = vmatpush1.msra.mxu0 0.0
  %855 = vmatprep.subr.mxu0 0.0
  %856 = vmatpush1.msra.mxu0 0.0
  %857 = vmatprep.subr.mxu0 0.0
  %858 = vmatpush1.msra.mxu0 0.0
  %859 = vmatprep.subr.mxu0 0.0
  %860 = vmatpush1.msra.mxu0 0.0
  %861 = vmatprep.subr.mxu0 0.0
  %862 = vmatpush1.msra.mxu0 0.0
  %863 = vmatprep.subr.mxu0 0.0
  %864 = vmatpush1.msra.mxu0 0.0
  %865 = vmatprep.subr.mxu0 0.0
  %866 = vmatpush1.msra.mxu0 0.0
  %867 = vmatprep.subr.mxu0 0.0
  %868 = vmatpush1.msra.mxu0 0.0
  %869 = vmatprep.subr.mxu0 0.0
  %870 = vmatpush1.msra.mxu0 0.0
  %871 = vmatprep.subr.mxu0 0.0
  %872 = vmatpush1.msra.mxu0 0.0
  %873 = vmatprep.subr.mxu0 0.0
  %874 = vmatpush1.msra.mxu0 0.0
  %875 = vmatprep.subr.mxu0 0.0
  %876 = vmatpush1.msra.mxu0 0.0
  %877 = vmatprep.subr.mxu0 0.0
  %878 = vmatpush1.msra.mxu0 0.0
  %879 = vmatprep.subr.mxu0 0.0
  %880 = vmatpush1.msra.mxu0 0.0
  %881 = vmatprep.subr.mxu0 0.0
  %882 = vmatpush1.msra.mxu0 0.0
  %883 = vmatprep.subr.mxu0 0.0
  %884 = vmatpush1.msra.mxu0 0.0
  %885 = vmatprep.subr.mxu0 0.0
  %886 = vmatpush1.msra.mxu0 0.0
  %887 = vmatprep.mubr.f32.mxu0 0.0
  %888 = vmatmul.mubr.f32.gmra.mrb[0].mxu0 %v821
  %v889 = vpop.f32.mrb[0].mxu0
  %v890 = vadd.f32 0.0, %v889
  %v891 = vpop.f32.mrb[0].mxu0
  %892 = vdwg.mxu0
  %v893 = vadd.f32 %v801, %v890
  %v894 = vld [vmem:[%s325] ss:$2 sm:$0xf]
  %s895 = scalar_lea.vmem [#allocation2], 13
  %v896 = vld [vmem:[%s895] ss:$2 sm:$0xf]
  %v898 = vrot.slane %v896, 4
  %v900 = vsel %vm632, %v894, %v898
  %s901 = scalar_lea.vmem %s2, 192
  %v902 = vld [vmem:[%s901] sm:$0xff]
  %v903 = vld [vmem:[%s901 + $0x8] sm:$0xff]
  %v904 = vld [vmem:[%s901 + $0x10] sm:$0xff]
  %v905 = vld [vmem:[%s901 + $0x18] sm:$0xff]
  %v906 = vld [vmem:[%s901 + $0x20] sm:$0xff]
  %v907 = vld [vmem:[%s901 + $0x28] sm:$0xff]
  %v908 = vld [vmem:[%s901 + $0x30] sm:$0xff]
  %v909 = vld [vmem:[%s901 + $0x38] sm:$0xff]
  %v911 = vsel %vm419, %v900, 0
  %913 = vmatprep.subr.mxu0 0.0
  %914 = vmatpush1.msra.mxu0 %v902
  %915 = vmatprep.subr.mxu0 0.0
  %916 = vmatpush1.msra.mxu0 %v903
  %917 = vmatprep.subr.mxu0 0.0
  %918 = vmatpush1.msra.mxu0 %v904
  %919 = vmatprep.subr.mxu0 0.0
  %920 = vmatpush1.msra.mxu0 %v905
  %921 = vmatprep.subr.mxu0 0.0
  %922 = vmatpush1.msra.mxu0 %v906
  %923 = vmatprep.subr.mxu0 0.0
  %924 = vmatpush1.msra.mxu0 %v907
  %925 = vmatprep.subr.mxu0 0.0
  %926 = vmatpush1.msra.mxu0 %v908
  %927 = vmatprep.subr.mxu0 0.0
  %928 = vmatpush1.msra.mxu0 %v909
  %929 = vmatprep.subr.mxu0 0.0
  %930 = vmatpush1.msra.mxu0 0.0
  %931 = vmatprep.subr.mxu0 0.0
  %932 = vmatpush1.msra.mxu0 0.0
  %933 = vmatprep.subr.mxu0 0.0
  %934 = vmatpush1.msra.mxu0 0.0
  %935 = vmatprep.subr.mxu0 0.0
  %936 = vmatpush1.msra.mxu0 0.0
  %937 = vmatprep.subr.mxu0 0.0
  %938 = vmatpush1.msra.mxu0 0.0
  %939 = vmatprep.subr.mxu0 0.0
  %940 = vmatpush1.msra.mxu0 0.0
  %941 = vmatprep.subr.mxu0 0.0
  %942 = vmatpush1.msra.mxu0 0.0
  %943 = vmatprep.subr.mxu0 0.0
  %944 = vmatpush1.msra.mxu0 0.0
  %945 = vmatprep.subr.mxu0 0.0
  %946 = vmatpush1.msra.mxu0 0.0
  %947 = vmatprep.subr.mxu0 0.0
  %948 = vmatpush1.msra.mxu0 0.0
  %949 = vmatprep.subr.mxu0 0.0
  %950 = vmatpush1.msra.mxu0 0.0
  %951 = vmatprep.subr.mxu0 0.0
  %952 = vmatpush1.msra.mxu0 0.0
  %953 = vmatprep.subr.mxu0 0.0
  %954 = vmatpush1.msra.mxu0 0.0
  %955 = vmatprep.subr.mxu0 0.0
  %956 = vmatpush1.msra.mxu0 0.0
  %957 = vmatprep.subr.mxu0 0.0
  %958 = vmatpush1.msra.mxu0 0.0
  %959 = vmatprep.subr.mxu0 0.0
  %960 = vmatpush1.msra.mxu0 0.0
  %961 = vmatprep.subr.mxu0 0.0
  %962 = vmatpush1.msra.mxu0 0.0
  %963 = vmatprep.subr.mxu0 0.0
  %964 = vmatpush1.msra.mxu0 0.0
  %965 = vmatprep.subr.mxu0 0.0
  %966 = vmatpush1.msra.mxu0 0.0
  %967 = vmatprep.subr.mxu0 0.0
  %968 = vmatpush1.msra.mxu0 0.0
  %969 = vmatprep.subr.mxu0 0.0
  %970 = vmatpush1.msra.mxu0 0.0
  %971 = vmatprep.subr.mxu0 0.0
  %972 = vmatpush1.msra.mxu0 0.0
  %973 = vmatprep.subr.mxu0 0.0
  %974 = vmatpush1.msra.mxu0 0.0
  %975 = vmatprep.subr.mxu0 0.0
  %976 = vmatpush1.msra.mxu0 0.0
  %977 = vmatprep.mubr.f32.mxu0 0.0
  %978 = vmatmul.mubr.f32.gmra.mrb[0].mxu0 %v911
  %v979 = vpop.f32.mrb[0].mxu0
  %v980 = vadd.f32 0.0, %v979
  %v981 = vpop.f32.mrb[0].mxu0
  %982 = vdwg.mxu0
  %v983 = vadd.f32 %v893, %v980
  %v984 = vsel %vm419, %v983, 0.0
  %v985 = vrot.slane %v984, 4
  %v986 = vadd.f32 %v984, %v985
  %v987 = vrot.slane %v986, 2
  %v988 = vadd.f32 %v986, %v987
  %v989 = vrot.slane %v988, 1
  %v990 = vadd.f32 %v988, %v989
  %v991 = vmul.f32 %v983, %v983
  %v992 = vsel %vm419, %v991, 0.0
  %v993 = vrot.slane %v992, 4
  %v994 = vadd.f32 %v992, %v993
  %v995 = vrot.slane %v994, 2
  %v996 = vadd.f32 %v994, %v995
  %v997 = vrot.slane %v996, 1
  %v998 = vadd.f32 %v996, %v997
  %v999 = vsel %vm440, %v990, %v998
  %s1000 = scalar_lea.vmem %s6, 64
  %v1001 = vld [vmem:[%s1000] sm:$0xff]
  %v1002 = vld [vmem:[%s1000 + $0x8] sm:$0xff]
  %v1003 = vld [vmem:[%s1000 + $0x10] sm:$0xff]
  %v1004 = vld [vmem:[%s1000 + $0x18] sm:$0xff]
  %v1005 = vld [vmem:[%s1000 + $0x20] sm:$0xff]
  %v1006 = vld [vmem:[%s1000 + $0x28] sm:$0xff]
  %v1007 = vld [vmem:[%s1000 + $0x30] sm:$0xff]
  %v1008 = vld [vmem:[%s1000 + $0x38] sm:$0xff]
  %v1010 = vsel %vm419, %v999, 0
  %1012 = vmatprep.subr.mxu0 0.0
  %1013 = vmatpush1.msra.mxu0 %v1001
  %1014 = vmatprep.subr.mxu0 0.0
  %1015 = vmatpush1.msra.mxu0 %v1002
  %1016 = vmatprep.subr.mxu0 0.0
  %1017 = vmatpush1.msra.mxu0 %v1003
  %1018 = vmatprep.subr.mxu0 0.0
  %1019 = vmatpush1.msra.mxu0 %v1004
  %1020 = vmatprep.subr.mxu0 0.0
  %1021 = vmatpush1.msra.mxu0 %v1005
  %1022 = vmatprep.subr.mxu0 0.0
  %1023 = vmatpush1.msra.mxu0 %v1006
  %1024 = vmatprep.subr.mxu0 0.0
  %1025 = vmatpush1.msra.mxu0 %v1007
  %1026 = vmatprep.subr.mxu0 0.0
  %1027 = vmatpush1.msra.mxu0 %v1008
  %1028 = vmatprep.subr.mxu0 0.0
  %1029 = vmatpush1.msra.mxu0 0.0
  %1030 = vmatprep.subr.mxu0 0.0
  %1031 = vmatpush1.msra.mxu0 0.0
  %1032 = vmatprep.subr.mxu0 0.0
  %1033 = vmatpush1.msra.mxu0 0.0
  %1034 = vmatprep.subr.mxu0 0.0
  %1035 = vmatpush1.msra.mxu0 0.0
  %1036 = vmatprep.subr.mxu0 0.0
  %1037 = vmatpush1.msra.mxu0 0.0
  %1038 = vmatprep.subr.mxu0 0.0
  %1039 = vmatpush1.msra.mxu0 0.0
  %1040 = vmatprep.subr.mxu0 0.0
  %1041 = vmatpush1.msra.mxu0 0.0
  %1042 = vmatprep.subr.mxu0 0.0
  %1043 = vmatpush1.msra.mxu0 0.0
  %1044 = vmatprep.subr.mxu0 0.0
  %1045 = vmatpush1.msra.mxu0 0.0
  %1046 = vmatprep.subr.mxu0 0.0
  %1047 = vmatpush1.msra.mxu0 0.0
  %1048 = vmatprep.subr.mxu0 0.0
  %1049 = vmatpush1.msra.mxu0 0.0
  %1050 = vmatprep.subr.mxu0 0.0
  %1051 = vmatpush1.msra.mxu0 0.0
  %1052 = vmatprep.subr.mxu0 0.0
  %1053 = vmatpush1.msra.mxu0 0.0
  %1054 = vmatprep.subr.mxu0 0.0
  %1055 = vmatpush1.msra.mxu0 0.0
  %1056 = vmatprep.subr.mxu0 0.0
  %1057 = vmatpush1.msra.mxu0 0.0
  %1058 = vmatprep.subr.mxu0 0.0
  %1059 = vmatpush1.msra.mxu0 0.0
  %1060 = vmatprep.subr.mxu0 0.0
  %1061 = vmatpush1.msra.mxu0 0.0
  %1062 = vmatprep.subr.mxu0 0.0
  %1063 = vmatpush1.msra.mxu0 0.0
  %1064 = vmatprep.subr.mxu0 0.0
  %1065 = vmatpush1.msra.mxu0 0.0
  %1066 = vmatprep.subr.mxu0 0.0
  %1067 = vmatpush1.msra.mxu0 0.0
  %1068 = vmatprep.subr.mxu0 0.0
  %1069 = vmatpush1.msra.mxu0 0.0
  %1070 = vmatprep.subr.mxu0 0.0
  %1071 = vmatpush1.msra.mxu0 0.0
  %1072 = vmatprep.subr.mxu0 0.0
  %1073 = vmatpush1.msra.mxu0 0.0
  %1074 = vmatprep.subr.mxu0 0.0
  %1075 = vmatpush1.msra.mxu0 0.0
  %1076 = vmatprep.mubr.f32.mxu0 0.0
  %1077 = vmatmul.mubr.f32.gmra.mrb[0].mxu0 %v1010
  %v1078 = vpop.f32.mrb[0].mxu0
  %v1079 = vadd.f32 0.0, %v1078
  %v1080 = vpop.f32.mrb[0].mxu0
  %1081 = vdwg.mxu0
  %v1082 = vmul.f32 %v1079, 0.03125
  %v1083 = vmul.f32 %v1082, %v1082
  %v1085 = vrot.slane %v1083, 7
  %v1087 = vsub.f32 %v1082, %v1085
  %v1088 = vld [vmem:[%s5 + $0x2] sm:$0x1]
  %v1089 = vld [vmem:[%s5 + $0x3] sm:$0x1]
  %v1090 = vadd.f32 %v1087, 1e-05
  %v1091 = vrsqrt.pop %v1090
  %v1093 = vrot.slane %v1091, 1
  %v1095 = vmul.f32 %v1088, %v1093
  %v1096 = vmul.f32 %v1082, %v1095
  %v1097 = vsub.f32 %v1089, %v1096
  %1099 = vrot.lane.b32.xlu0 %v1095, 16
  %v1100 = vpop.permute.xlu0 %1099
  %1102 = vrot.lane.b32.xlu0 %v1095, 32
  %v1103 = vpop.permute.xlu0 %1102
  %1105 = vrot.lane.b32.xlu0 %v1095, 48
  %v1106 = vpop.permute.xlu0 %1105
  %v1108 = vsel %vm563, %v1095, %v1100
  %v1109 = vsel %vm567, %v1108, %v1103
  %v1110 = vsel %vm44, %v1109, %v1106
  %1112 = vrot.lane.b32.xlu0 %v1097, 16
  %v1113 = vpop.permute.xlu0 %1112
  %1115 = vrot.lane.b32.xlu0 %v1097, 32
  %v1116 = vpop.permute.xlu0 %1115
  %1118 = vrot.lane.b32.xlu0 %v1097, 48
  %v1119 = vpop.permute.xlu0 %1118
  %v1121 = vsel %vm563, %v1097, %v1113
  %v1122 = vsel %vm567, %v1121, %v1116
  %v1123 = vsel %vm44, %v1122, %v1119
  %v1124 = vlaneseq
  %v1125 = vshrl.u32 %v1124, 7
  %v1126 = vsub.s32 0, %v1125
  %v1127 = vrot.slane %v1110, %v1126
  %v1128 = vmul.f32 %v983, %v1127
  %v1129 = vlaneseq
  %v1130 = vshrl.u32 %v1129, 7
  %v1131 = vsub.s32 0, %v1130
  %v1132 = vrot.slane %v1123, %v1131
  %v1133 = vadd.f32 %v1128, %v1132
  %v1134 = vmul.f32 %v1133, 0.2
  %v1135 = vmax.f32 %v1133, %v1134
  %1136 = vst [vmem:[#allocation2] sm:$0xff] 0.0
  %1137 = vst [vmem:[#allocation2 + $0x8] sm:$0xff] 0.0
  %1138 = vst [vmem:[#allocation2 + $0x10] sm:$0xff] 0.0
  %1139 = vst [vmem:[#allocation2 + $0x18] sm:$0xff] 0.0
  %1140 = vst [vmem:[#allocation2 + $0x20] sm:$0xff] 0.0
  %vm1141 = vcmask 519168
  %1142 = vst.msk [vmem:[#allocation2 + $0x1] sm:$0xf] %vm1141, %v1135
  %vm1143 = vcmask 523268
  %1144 = vst.msk [vmem:[#allocation2 + $0x3] sm:$0xf0] %vm1143, %v1135
  %v1145 = vld [vmem:[#allocation2] ss:$2 sm:$0x3]
  %s1146 = scalar_lea.vmem [#allocation2], 6
  %v1147 = vld [vmem:[%s1146] ss:$2 sm:$0x3]
  %v1149 = vrot.slane %v1147, 6
  %vm1151 = vcmask 1041408
  %v1152 = vsel %vm1151, %v1145, %v1149
  %v1153 = vld [vmem:[%s3] sm:$0xff]
  %v1154 = vld [vmem:[%s3 + $0x8] sm:$0xff]
  %v1155 = vld [vmem:[%s3 + $0x10] sm:$0xff]
  %v1156 = vld [vmem:[%s3 + $0x18] sm:$0xff]
  %v1157 = vld [vmem:[%s3 + $0x20] sm:$0xff]
  %v1158 = vld [vmem:[%s3 + $0x28] sm:$0xff]
  %v1159 = vld [vmem:[%s3 + $0x30] sm:$0xff]
  %v1160 = vld [vmem:[%s3 + $0x38] sm:$0xff]
  %v1161 = vld [vmem:[%s58] ss:$2 sm:$0x3]
  %s1162 = scalar_lea.vmem [#allocation2], 7
  %v1163 = vld [vmem:[%s1162] ss:$2 sm:$0x3]
  %v1165 = vrot.slane %v1163, 6
  %v1167 = vsel %vm1151, %v1161, %v1165
  %s1168 = scalar_lea.vmem %s3, 64
  %v1169 = vld [vmem:[%s1168] sm:$0xff]
  %v1170 = vld [vmem:[%s1168 + $0x8] sm:$0xff]
  %v1171 = vld [vmem:[%s1168 + $0x10] sm:$0xff]
  %v1172 = vld [vmem:[%s1168 + $0x18] sm:$0xff]
  %v1173 = vld [vmem:[%s1168 + $0x20] sm:$0xff]
  %v1174 = vld [vmem:[%s1168 + $0x28] sm:$0xff]
  %v1175 = vld [vmem:[%s1168 + $0x30] sm:$0xff]
  %v1176 = vld [vmem:[%s1168 + $0x38] sm:$0xff]
  %v1178 = vsel %vm419, %v1167, 0
  %1180 = vmatprep.subr.mxu0 0.0
  %1181 = vmatpush1.msra.mxu0 %v1169
  %1182 = vmatprep.subr.mxu0 0.0
  %1183 = vmatpush1.msra.mxu0 %v1170
  %1184 = vmatprep.subr.mxu0 0.0
  %1185 = vmatpush1.msra.mxu0 %v1171
  %1186 = vmatprep.subr.mxu0 0.0
  %1187 = vmatpush1.msra.mxu0 %v1172
  %1188 = vmatprep.subr.mxu0 0.0
  %1189 = vmatpush1.msra.mxu0 %v1173
  %1190 = vmatprep.subr.mxu0 0.0
  %1191 = vmatpush1.msra.mxu0 %v1174
  %1192 = vmatprep.subr.mxu0 0.0
  %1193 = vmatpush1.msra.mxu0 %v1175
  %1194 = vmatprep.subr.mxu0 0.0
  %1195 = vmatpush1.msra.mxu0 %v1176
  %1196 = vmatprep.subr.mxu0 0.0
  %1197 = vmatpush1.msra.mxu0 0.0
  %1198 = vmatprep.subr.mxu0 0.0
  %1199 = vmatpush1.msra.mxu0 0.0
  %1200 = vmatprep.subr.mxu0 0.0
  %1201 = vmatpush1.msra.mxu0 0.0
  %1202 = vmatprep.subr.mxu0 0.0
  %1203 = vmatpush1.msra.mxu0 0.0
  %1204 = vmatprep.subr.mxu0 0.0
  %1205 = vmatpush1.msra.mxu0 0.0
  %1206 = vmatprep.subr.mxu0 0.0
  %1207 = vmatpush1.msra.mxu0 0.0
  %1208 = vmatprep.subr.mxu0 0.0
  %1209 = vmatpush1.msra.mxu0 0.0
  %1210 = vmatprep.subr.mxu0 0.0
  %1211 = vmatpush1.msra.mxu0 0.0
  %1212 = vmatprep.subr.mxu0 0.0
  %1213 = vmatpush1.msra.mxu0 0.0
  %1214 = vmatprep.subr.mxu0 0.0
  %1215 = vmatpush1.msra.mxu0 0.0
  %1216 = vmatprep.subr.mxu0 0.0
  %1217 = vmatpush1.msra.mxu0 0.0
  %1218 = vmatprep.subr.mxu0 0.0
  %1219 = vmatpush1.msra.mxu0 0.0
  %1220 = vmatprep.subr.mxu0 0.0
  %1221 = vmatpush1.msra.mxu0 0.0
  %1222 = vmatprep.subr.mxu0 0.0
  %1223 = vmatpush1.msra.mxu0 0.0
  %1224 = vmatprep.subr.mxu0 0.0
  %1225 = vmatpush1.msra.mxu0 0.0
  %1226 = vmatprep.subr.mxu0 0.0
  %1227 = vmatpush1.msra.mxu0 0.0
  %1228 = vmatprep.subr.mxu0 0.0
  %1229 = vmatpush1.msra.mxu0 0.0
  %1230 = vmatprep.subr.mxu0 0.0
  %1231 = vmatpush1.msra.mxu0 0.0
  %1232 = vmatprep.subr.mxu0 0.0
  %1233 = vmatpush1.msra.mxu0 0.0
  %1234 = vmatprep.subr.mxu0 0.0
  %1235 = vmatpush1.msra.mxu0 0.0
  %1236 = vmatprep.subr.mxu0 0.0
  %1237 = vmatpush1.msra.mxu0 0.0
  %1238 = vmatprep.subr.mxu0 0.0
  %1239 = vmatpush1.msra.mxu0 0.0
  %1240 = vmatprep.subr.mxu0 0.0
  %1241 = vmatpush1.msra.mxu0 0.0
  %1242 = vmatprep.subr.mxu0 0.0
  %1243 = vmatpush1.msra.mxu0 0.0
  %1244 = vmatprep.mubr.f32.mxu0 0.0
  %1245 = vmatmul.mubr.f32.gmra.mrb[0].mxu0 %v1178
  %v1246 = vpop.f32.mrb[0].mxu0
  %v1247 = vadd.f32 0.0, %v1246
  %v1248 = vpop.f32.mrb[0].mxu0
  %1249 = vdwg.mxu0
  %v1251 = vsel %vm419, %v1152, 0
  %1253 = vmatprep.subr.mxu0 0.0
  %1254 = vmatpush1.msra.mxu0 %v1153
  %1255 = vmatprep.subr.mxu0 0.0
  %1256 = vmatpush1.msra.mxu0 %v1154
  %1257 = vmatprep.subr.mxu0 0.0
  %1258 = vmatpush1.msra.mxu0 %v1155
  %1259 = vmatprep.subr.mxu0 0.0
  %1260 = vmatpush1.msra.mxu0 %v1156
  %1261 = vmatprep.subr.mxu0 0.0
  %1262 = vmatpush1.msra.mxu0 %v1157
  %1263 = vmatprep.subr.mxu0 0.0
  %1264 = vmatpush1.msra.mxu0 %v1158
  %1265 = vmatprep.subr.mxu0 0.0
  %1266 = vmatpush1.msra.mxu0 %v1159
  %1267 = vmatprep.subr.mxu0 0.0
  %1268 = vmatpush1.msra.mxu0 %v1160
  %1269 = vmatprep.subr.mxu0 0.0
  %1270 = vmatpush1.msra.mxu0 0.0
  %1271 = vmatprep.subr.mxu0 0.0
  %1272 = vmatpush1.msra.mxu0 0.0
  %1273 = vmatprep.subr.mxu0 0.0
  %1274 = vmatpush1.msra.mxu0 0.0
  %1275 = vmatprep.subr.mxu0 0.0
  %1276 = vmatpush1.msra.mxu0 0.0
  %1277 = vmatprep.subr.mxu0 0.0
  %1278 = vmatpush1.msra.mxu0 0.0
  %1279 = vmatprep.subr.mxu0 0.0
  %1280 = vmatpush1.msra.mxu0 0.0
  %1281 = vmatprep.subr.mxu0 0.0
  %1282 = vmatpush1.msra.mxu0 0.0
  %1283 = vmatprep.subr.mxu0 0.0
  %1284 = vmatpush1.msra.mxu0 0.0
  %1285 = vmatprep.subr.mxu0 0.0
  %1286 = vmatpush1.msra.mxu0 0.0
  %1287 = vmatprep.subr.mxu0 0.0
  %1288 = vmatpush1.msra.mxu0 0.0
  %1289 = vmatprep.subr.mxu0 0.0
  %1290 = vmatpush1.msra.mxu0 0.0
  %1291 = vmatprep.subr.mxu0 0.0
  %1292 = vmatpush1.msra.mxu0 0.0
  %1293 = vmatprep.subr.mxu0 0.0
  %1294 = vmatpush1.msra.mxu0 0.0
  %1295 = vmatprep.subr.mxu0 0.0
  %1296 = vmatpush1.msra.mxu0 0.0
  %1297 = vmatprep.subr.mxu0 0.0
  %1298 = vmatpush1.msra.mxu0 0.0
  %1299 = vmatprep.subr.mxu0 0.0
  %1300 = vmatpush1.msra.mxu0 0.0
  %1301 = vmatprep.subr.mxu0 0.0
  %1302 = vmatpush1.msra.mxu0 0.0
  %1303 = vmatprep.subr.mxu0 0.0
  %1304 = vmatpush1.msra.mxu0 0.0
  %1305 = vmatprep.subr.mxu0 0.0
  %1306 = vmatpush1.msra.mxu0 0.0
  %1307 = vmatprep.subr.mxu0 0.0
  %1308 = vmatpush1.msra.mxu0 0.0
  %1309 = vmatprep.subr.mxu0 0.0
  %1310 = vmatpush1.msra.mxu0 0.0
  %1311 = vmatprep.subr.mxu0 0.0
  %1312 = vmatpush1.msra.mxu0 0.0
  %1313 = vmatprep.subr.mxu0 0.0
  %1314 = vmatpush1.msra.mxu0 0.0
  %1315 = vmatprep.subr.mxu0 0.0
  %1316 = vmatpush1.msra.mxu0 0.0
  %1317 = vmatprep.mubr.f32.mxu0 0.0
  %1318 = vmatmul.mubr.f32.gmra.mrb[0].mxu0 %v1251
  %v1319 = vpop.f32.mrb[0].mxu0
  %v1320 = vadd.f32 %v1247, %v1319
  %v1321 = vpop.f32.mrb[0].mxu0
  %1322 = vdwg.mxu0
  %v1323 = vld [vmem:[%s231] ss:$2 sm:$0x3]
  %s1324 = scalar_lea.vmem [#allocation2], 8
  %v1325 = vld [vmem:[%s1324] ss:$2 sm:$0x3]
  %v1327 = vrot.slane %v1325, 6
  %v1329 = vsel %vm1151, %v1323, %v1327
  %s1330 = scalar_lea.vmem %s3, 128
  %v1331 = vld [vmem:[%s1330] sm:$0xff]
  %v1332 = vld [vmem:[%s1330 + $0x8] sm:$0xff]
  %v1333 = vld [vmem:[%s1330 + $0x10] sm:$0xff]
  %v1334 = vld [vmem:[%s1330 + $0x18] sm:$0xff]
  %v1335 = vld [vmem:[%s1330 + $0x20] sm:$0xff]
  %v1336 = vld [vmem:[%s1330 + $0x28] sm:$0xff]
  %v1337 = vld [vmem:[%s1330 + $0x30] sm:$0xff]
  %v1338 = vld [vmem:[%s1330 + $0x38] sm:$0xff]
  %v1340 = vsel %vm419, %v1329, 0
  %1342 = vmatprep.subr.mxu0 0.0
  %1343 = vmatpush1.msra.mxu0 %v1331
  %1344 = vmatprep.subr.mxu0 0.0
  %1345 = vmatpush1.msra.mxu0 %v1332
  %1346 = vmatprep.subr.mxu0 0.0
  %1347 = vmatpush1.msra.mxu0 %v1333
  %1348 = vmatprep.subr.mxu0 0.0
  %1349 = vmatpush1.msra.mxu0 %v1334
  %1350 = vmatprep.subr.mxu0 0.0
  %1351 = vmatpush1.msra.mxu0 %v1335
  %1352 = vmatprep.subr.mxu0 0.0
  %1353 = vmatpush1.msra.mxu0 %v1336
  %1354 = vmatprep.subr.mxu0 0.0
  %1355 = vmatpush1.msra.mxu0 %v1337
  %1356 = vmatprep.subr.mxu0 0.0
  %1357 = vmatpush1.msra.mxu0 %v1338
  %1358 = vmatprep.subr.mxu0 0.0
  %1359 = vmatpush1.msra.mxu0 0.0
  %1360 = vmatprep.subr.mxu0 0.0
  %1361 = vmatpush1.msra.mxu0 0.0
  %1362 = vmatprep.subr.mxu0 0.0
  %1363 = vmatpush1.msra.mxu0 0.0
  %1364 = vmatprep.subr.mxu0 0.0
  %1365 = vmatpush1.msra.mxu0 0.0
  %1366 = vmatprep.subr.mxu0 0.0
  %1367 = vmatpush1.msra.mxu0 0.0
  %1368 = vmatprep.subr.mxu0 0.0
  %1369 = vmatpush1.msra.mxu0 0.0
  %1370 = vmatprep.subr.mxu0 0.0
  %1371 = vmatpush1.msra.mxu0 0.0
  %1372 = vmatprep.subr.mxu0 0.0
  %1373 = vmatpush1.msra.mxu0 0.0
  %1374 = vmatprep.subr.mxu0 0.0
  %1375 = vmatpush1.msra.mxu0 0.0
  %1376 = vmatprep.subr.mxu0 0.0
  %1377 = vmatpush1.msra.mxu0 0.0
  %1378 = vmatprep.subr.mxu0 0.0
  %1379 = vmatpush1.msra.mxu0 0.0
  %1380 = vmatprep.subr.mxu0 0.0
  %1381 = vmatpush1.msra.mxu0 0.0
  %1382 = vmatprep.subr.mxu0 0.0
  %1383 = vmatpush1.msra.mxu0 0.0
  %1384 = vmatprep.subr.mxu0 0.0
  %1385 = vmatpush1.msra.mxu0 0.0
  %1386 = vmatprep.subr.mxu0 0.0
  %1387 = vmatpush1.msra.mxu0 0.0
  %1388 = vmatprep.subr.mxu0 0.0
  %1389 = vmatpush1.msra.mxu0 0.0
  %1390 = vmatprep.subr.mxu0 0.0
  %1391 = vmatpush1.msra.mxu0 0.0
  %1392 = vmatprep.subr.mxu0 0.0
  %1393 = vmatpush1.msra.mxu0 0.0
  %1394 = vmatprep.subr.mxu0 0.0
  %1395 = vmatpush1.msra.mxu0 0.0
  %1396 = vmatprep.subr.mxu0 0.0
  %1397 = vmatpush1.msra.mxu0 0.0
  %1398 = vmatprep.subr.mxu0 0.0
  %1399 = vmatpush1.msra.mxu0 0.0
  %1400 = vmatprep.subr.mxu0 0.0
  %1401 = vmatpush1.msra.mxu0 0.0
  %1402 = vmatprep.subr.mxu0 0.0
  %1403 = vmatpush1.msra.mxu0 0.0
  %1404 = vmatprep.subr.mxu0 0.0
  %1405 = vmatpush1.msra.mxu0 0.0
  %1406 = vmatprep.mubr.f32.mxu0 0.0
  %1407 = vmatmul.mubr.f32.gmra.mrb[0].mxu0 %v1340
  %v1408 = vpop.f32.mrb[0].mxu0
  %v1409 = vadd.f32 0.0, %v1408
  %v1410 = vpop.f32.mrb[0].mxu0
  %1411 = vdwg.mxu0
  %v1412 = vadd.f32 %v1320, %v1409
  %v1413 = vld [vmem:[%s325] ss:$2 sm:$0x3]
  %s1414 = scalar_lea.vmem [#allocation2], 9
  %v1415 = vld [vmem:[%s1414] ss:$2 sm:$0x3]
  %v1417 = vrot.slane %v1415, 6
  %v1419 = vsel %vm1151, %v1413, %v1417
  %s1420 = scalar_lea.vmem %s3, 192
  %v1421 = vld [vmem:[%s1420] sm:$0xff]
  %v1422 = vld [vmem:[%s1420 + $0x8] sm:$0xff]
  %v1423 = vld [vmem:[%s1420 + $0x10] sm:$0xff]
  %v1424 = vld [vmem:[%s1420 + $0x18] sm:$0xff]
  %v1425 = vld [vmem:[%s1420 + $0x20] sm:$0xff]
  %v1426 = vld [vmem:[%s1420 + $0x28] sm:$0xff]
  %v1427 = vld [vmem:[%s1420 + $0x30] sm:$0xff]
  %v1428 = vld [vmem:[%s1420 + $0x38] sm:$0xff]
  %v1430 = vsel %vm419, %v1419, 0
  %1432 = vmatprep.subr.mxu0 0.0
  %1433 = vmatpush1.msra.mxu0 %v1421
  %1434 = vmatprep.subr.mxu0 0.0
  %1435 = vmatpush1.msra.mxu0 %v1422
  %1436 = vmatprep.subr.mxu0 0.0
  %1437 = vmatpush1.msra.mxu0 %v1423
  %1438 = vmatprep.subr.mxu0 0.0
  %1439 = vmatpush1.msra.mxu0 %v1424
  %1440 = vmatprep.subr.mxu0 0.0
  %1441 = vmatpush1.msra.mxu0 %v1425
  %1442 = vmatprep.subr.mxu0 0.0
  %1443 = vmatpush1.msra.mxu0 %v1426
  %1444 = vmatprep.subr.mxu0 0.0
  %1445 = vmatpush1.msra.mxu0 %v1427
  %1446 = vmatprep.subr.mxu0 0.0
  %1447 = vmatpush1.msra.mxu0 %v1428
  %1448 = vmatprep.subr.mxu0 0.0
  %1449 = vmatpush1.msra.mxu0 0.0
  %1450 = vmatprep.subr.mxu0 0.0
  %1451 = vmatpush1.msra.mxu0 0.0
  %1452 = vmatprep.subr.mxu0 0.0
  %1453 = vmatpush1.msra.mxu0 0.0
  %1454 = vmatprep.subr.mxu0 0.0
  %1455 = vmatpush1.msra.mxu0 0.0
  %1456 = vmatprep.subr.mxu0 0.0
  %1457 = vmatpush1.msra.mxu0 0.0
  %1458 = vmatprep.subr.mxu0 0.0
  %1459 = vmatpush1.msra.mxu0 0.0
  %1460 = vmatprep.subr.mxu0 0.0
  %1461 = vmatpush1.msra.mxu0 0.0
  %1462 = vmatprep.subr.mxu0 0.0
  %1463 = vmatpush1.msra.mxu0 0.0
  %1464 = vmatprep.subr.mxu0 0.0
  %1465 = vmatpush1.msra.mxu0 0.0
  %1466 = vmatprep.subr.mxu0 0.0
  %1467 = vmatpush1.msra.mxu0 0.0
  %1468 = vmatprep.subr.mxu0 0.0
  %1469 = vmatpush1.msra.mxu0 0.0
  %1470 = vmatprep.subr.mxu0 0.0
  %1471 = vmatpush1.msra.mxu0 0.0
  %1472 = vmatprep.subr.mxu0 0.0
  %1473 = vmatpush1.msra.mxu0 0.0
  %1474 = vmatprep.subr.mxu0 0.0
  %1475 = vmatpush1.msra.mxu0 0.0
  %1476 = vmatprep.subr.mxu0 0.0
  %1477 = vmatpush1.msra.mxu0 0.0
  %1478 = vmatprep.subr.mxu0 0.0
  %1479 = vmatpush1.msra.mxu0 0.0
  %1480 = vmatprep.subr.mxu0 0.0
  %1481 = vmatpush1.msra.mxu0 0.0
  %1482 = vmatprep.subr.mxu0 0.0
  %1483 = vmatpush1.msra.mxu0 0.0
  %1484 = vmatprep.subr.mxu0 0.0
  %1485 = vmatpush1.msra.mxu0 0.0
  %1486 = vmatprep.subr.mxu0 0.0
  %1487 = vmatpush1.msra.mxu0 0.0
  %1488 = vmatprep.subr.mxu0 0.0
  %1489 = vmatpush1.msra.mxu0 0.0
  %1490 = vmatprep.subr.mxu0 0.0
  %1491 = vmatpush1.msra.mxu0 0.0
  %1492 = vmatprep.subr.mxu0 0.0
  %1493 = vmatpush1.msra.mxu0 0.0
  %1494 = vmatprep.subr.mxu0 0.0
  %1495 = vmatpush1.msra.mxu0 0.0
  %1496 = vmatprep.mubr.f32.mxu0 0.0
  %1497 = vmatmul.mubr.f32.gmra.mrb[0].mxu0 %v1430
  %v1498 = vpop.f32.mrb[0].mxu0
  %v1499 = vadd.f32 0.0, %v1498
  %v1500 = vpop.f32.mrb[0].mxu0
  %1501 = vdwg.mxu0
  %v1502 = vadd.f32 %v1412, %v1499
  %v1503 = vsel %vm1141, %v1502, 0.0
  %v1504 = vrot.slane %v1503, 4
  %v1505 = vadd.f32 %v1503, %v1504
  %v1506 = vrot.slane %v1505, 2
  %v1507 = vadd.f32 %v1505, %v1506
  %v1508 = vrot.slane %v1507, 1
  %v1509 = vadd.f32 %v1507, %v1508
  %v1510 = vmul.f32 %v1502, %v1502
  %v1511 = vsel %vm1141, %v1510, 0.0
  %v1512 = vrot.slane %v1511, 4
  %v1513 = vadd.f32 %v1511, %v1512
  %v1514 = vrot.slane %v1513, 2
  %v1515 = vadd.f32 %v1513, %v1514
  %v1516 = vrot.slane %v1515, 1
  %v1517 = vadd.f32 %v1515, %v1516
  %v1518 = vsel %vm440, %v1509, %v1517
  %s1519 = scalar_lea.vmem %s6, 128
  %v1520 = vld [vmem:[%s1519] sm:$0xff]
  %v1521 = vld [vmem:[%s1519 + $0x8] sm:$0xff]
  %v1522 = vld [vmem:[%s1519 + $0x10] sm:$0xff]
  %v1523 = vld [vmem:[%s1519 + $0x18] sm:$0xff]
  %v1524 = vld [vmem:[%s1519 + $0x20] sm:$0xff]
  %v1525 = vld [vmem:[%s1519 + $0x28] sm:$0xff]
  %v1526 = vld [vmem:[%s1519 + $0x30] sm:$0xff]
  %v1527 = vld [vmem:[%s1519 + $0x38] sm:$0xff]
  %v1529 = vsel %vm419, %v1518, 0
  %1531 = vmatprep.subr.mxu0 0.0
  %1532 = vmatpush1.msra.mxu0 %v1520
  %1533 = vmatprep.subr.mxu0 0.0
  %1534 = vmatpush1.msra.mxu0 %v1521
  %1535 = vmatprep.subr.mxu0 0.0
  %1536 = vmatpush1.msra.mxu0 %v1522
  %1537 = vmatprep.subr.mxu0 0.0
  %1538 = vmatpush1.msra.mxu0 %v1523
  %1539 = vmatprep.subr.mxu0 0.0
  %1540 = vmatpush1.msra.mxu0 %v1524
  %1541 = vmatprep.subr.mxu0 0.0
  %1542 = vmatpush1.msra.mxu0 %v1525
  %1543 = vmatprep.subr.mxu0 0.0
  %1544 = vmatpush1.msra.mxu0 %v1526
  %1545 = vmatprep.subr.mxu0 0.0
  %1546 = vmatpush1.msra.mxu0 %v1527
  %1547 = vmatprep.subr.mxu0 0.0
  %1548 = vmatpush1.msra.mxu0 0.0
  %1549 = vmatprep.subr.mxu0 0.0
  %1550 = vmatpush1.msra.mxu0 0.0
  %1551 = vmatprep.subr.mxu0 0.0
  %1552 = vmatpush1.msra.mxu0 0.0
  %1553 = vmatprep.subr.mxu0 0.0
  %1554 = vmatpush1.msra.mxu0 0.0
  %1555 = vmatprep.subr.mxu0 0.0
  %1556 = vmatpush1.msra.mxu0 0.0
  %1557 = vmatprep.subr.mxu0 0.0
  %1558 = vmatpush1.msra.mxu0 0.0
  %1559 = vmatprep.subr.mxu0 0.0
  %1560 = vmatpush1.msra.mxu0 0.0
  %1561 = vmatprep.subr.mxu0 0.0
  %1562 = vmatpush1.msra.mxu0 0.0
  %1563 = vmatprep.subr.mxu0 0.0
  %1564 = vmatpush1.msra.mxu0 0.0
  %1565 = vmatprep.subr.mxu0 0.0
  %1566 = vmatpush1.msra.mxu0 0.0
  %1567 = vmatprep.subr.mxu0 0.0
  %1568 = vmatpush1.msra.mxu0 0.0
  %1569 = vmatprep.subr.mxu0 0.0
  %1570 = vmatpush1.msra.mxu0 0.0
  %1571 = vmatprep.subr.mxu0 0.0
  %1572 = vmatpush1.msra.mxu0 0.0
  %1573 = vmatprep.subr.mxu0 0.0
  %1574 = vmatpush1.msra.mxu0 0.0
  %1575 = vmatprep.subr.mxu0 0.0
  %1576 = vmatpush1.msra.mxu0 0.0
  %1577 = vmatprep.subr.mxu0 0.0
  %1578 = vmatpush1.msra.mxu0 0.0
  %1579 = vmatprep.subr.mxu0 0.0
  %1580 = vmatpush1.msra.mxu0 0.0
  %1581 = vmatprep.subr.mxu0 0.0
  %1582 = vmatpush1.msra.mxu0 0.0
  %1583 = vmatprep.subr.mxu0 0.0
  %1584 = vmatpush1.msra.mxu0 0.0
  %1585 = vmatprep.subr.mxu0 0.0
  %1586 = vmatpush1.msra.mxu0 0.0
  %1587 = vmatprep.subr.mxu0 0.0
  %1588 = vmatpush1.msra.mxu0 0.0
  %1589 = vmatprep.subr.mxu0 0.0
  %1590 = vmatpush1.msra.mxu0 0.0
  %1591 = vmatprep.subr.mxu0 0.0
  %1592 = vmatpush1.msra.mxu0 0.0
  %1593 = vmatprep.subr.mxu0 0.0
  %1594 = vmatpush1.msra.mxu0 0.0
  %1595 = vmatprep.mubr.f32.mxu0 0.0
  %1596 = vmatmul.mubr.f32.gmra.mrb[0].mxu0 %v1529
  %v1597 = vpop.f32.mrb[0].mxu0
  %v1598 = vadd.f32 0.0, %v1597
  %v1599 = vpop.f32.mrb[0].mxu0
  %1600 = vdwg.mxu0
  %v1601 = vmul.f32 %v1598, 0.125
  %v1602 = vmul.f32 %v1601, %v1601
  %v1604 = vrot.slane %v1602, 7
  %v1606 = vsub.f32 %v1601, %v1604
  %v1607 = vld [vmem:[%s5 + $0x4] sm:$0x1]
  %v1608 = vld [vmem:[%s5 + $0x5] sm:$0x1]
  %v1609 = vadd.f32 %v1606, 1e-05
  %v1610 = vrsqrt.pop %v1609
  %v1612 = vrot.slane %v1610, 1
  %v1614 = vmul.f32 %v1607, %v1612
  %v1615 = vmul.f32 %v1601, %v1614
  %v1616 = vsub.f32 %v1608, %v1615
  %1618 = vrot.lane.b32.xlu0 %v1614, 32
  %v1619 = vpop.permute.xlu0 %1618
  %v1621 = vsel %vm567, %v1614, %v1619
  %1623 = vrot.lane.b32.xlu0 %v1616, 32
  %v1624 = vpop.permute.xlu0 %1623
  %v1626 = vsel %vm567, %v1616, %v1624
  %v1627 = vlaneseq
  %v1628 = vshrl.u32 %v1627, 7
  %v1629 = vsub.s32 0, %v1628
  %v1630 = vrot.slane %v1621, %v1629
  %v1631 = vmul.f32 %v1502, %v1630
  %v1632 = vlaneseq
  %v1633 = vshrl.u32 %v1632, 7
  %v1634 = vsub.s32 0, %v1633
  %v1635 = vrot.slane %v1626, %v1634
  %v1636 = vadd.f32 %v1631, %v1635
  %v1637 = vmul.f32 %v1636, 0.2
  %v1638 = vmax.f32 %v1636, %v1637
  %1639 = vst [vmem:[#allocation2] sm:$0xff] 0.0
  %1640 = vst [vmem:[#allocation2 + $0x8] sm:$0xff] 0.0
  %1641 = vst [vmem:[#allocation2 + $0x10] sm:$0xff] 0.0
  %1642 = vst [vmem:[#allocation2 + $0x18] sm:$0xff] 0.0
  %1643 = vst [vmem:[#allocation2 + $0x20] sm:$0xff] 0.0
  %vm1644 = vcmask 517120
  %1645 = vst.msk [vmem:[#allocation2 + $0x1] sm:$0x3] %vm1644, %v1638
  %vm1646 = vcmask 519170
  %1647 = vst.msk [vmem:[#allocation2 + $0x3] sm:$0xc] %vm1646, %v1638
  %v1648 = vld [vmem:[#allocation2] ss:$2 sm:$0x1]
  %s1649 = scalar_lea.vmem [#allocation2], 4
  %v1650 = vld [vmem:[%s1649] ss:$2 sm:$0x1]
  %v1652 = vrot.slane %v1650, 7
  %v1654 = vsel %vm440, %v1648, %v1652
  %v1655 = vld [vmem:[%s4] sm:$0xff]
  %v1656 = vld [vmem:[%s4 + $0x8] sm:$0xff]
  %v1657 = vld [vmem:[%s4 + $0x10] sm:$0xff]
  %v1658 = vld [vmem:[%s4 + $0x18] sm:$0xff]
  %v1659 = vld [vmem:[%s4 + $0x20] sm:$0xff]
  %v1660 = vld [vmem:[%s4 + $0x28] sm:$0xff]
  %v1661 = vld [vmem:[%s4 + $0x30] sm:$0xff]
  %v1662 = vld [vmem:[%s4 + $0x38] sm:$0xff]
  %v1663 = vld [vmem:[%s58] ss:$2 sm:$0x1]
  %s1664 = scalar_lea.vmem [#allocation2], 5
  %v1665 = vld [vmem:[%s1664] ss:$2 sm:$0x1]
  %v1667 = vrot.slane %v1665, 7
  %v1669 = vsel %vm440, %v1663, %v1667
  %s1670 = scalar_lea.vmem %s4, 64
  %v1671 = vld [vmem:[%s1670] sm:$0xff]
  %v1672 = vld [vmem:[%s1670 + $0x8] sm:$0xff]
  %v1673 = vld [vmem:[%s1670 + $0x10] sm:$0xff]
  %v1674 = vld [vmem:[%s1670 + $0x18] sm:$0xff]
  %v1675 = vld [vmem:[%s1670 + $0x20] sm:$0xff]
  %v1676 = vld [vmem:[%s1670 + $0x28] sm:$0xff]
  %v1677 = vld [vmem:[%s1670 + $0x30] sm:$0xff]
  %v1678 = vld [vmem:[%s1670 + $0x38] sm:$0xff]
  %v1680 = vsel %vm419, %v1669, 0
  %1682 = vmatprep.subr.mxu0 0.0
  %1683 = vmatpush1.msra.mxu0 %v1671
  %1684 = vmatprep.subr.mxu0 0.0
  %1685 = vmatpush1.msra.mxu0 %v1672
  %1686 = vmatprep.subr.mxu0 0.0
  %1687 = vmatpush1.msra.mxu0 %v1673
  %1688 = vmatprep.subr.mxu0 0.0
  %1689 = vmatpush1.msra.mxu0 %v1674
  %1690 = vmatprep.subr.mxu0 0.0
  %1691 = vmatpush1.msra.mxu0 %v1675
  %1692 = vmatprep.subr.mxu0 0.0
  %1693 = vmatpush1.msra.mxu0 %v1676
  %1694 = vmatprep.subr.mxu0 0.0
  %1695 = vmatpush1.msra.mxu0 %v1677
  %1696 = vmatprep.subr.mxu0 0.0
  %1697 = vmatpush1.msra.mxu0 %v1678
  %1698 = vmatprep.subr.mxu0 0.0
  %1699 = vmatpush1.msra.mxu0 0.0
  %1700 = vmatprep.subr.mxu0 0.0
  %1701 = vmatpush1.msra.mxu0 0.0
  %1702 = vmatprep.subr.mxu0 0.0
  %1703 = vmatpush1.msra.mxu0 0.0
  %1704 = vmatprep.subr.mxu0 0.0
  %1705 = vmatpush1.msra.mxu0 0.0
  %1706 = vmatprep.subr.mxu0 0.0
  %1707 = vmatpush1.msra.mxu0 0.0
  %1708 = vmatprep.subr.mxu0 0.0
  %1709 = vmatpush1.msra.mxu0 0.0
  %1710 = vmatprep.subr.mxu0 0.0
  %1711 = vmatpush1.msra.mxu0 0.0
  %1712 = vmatprep.subr.mxu0 0.0
  %1713 = vmatpush1.msra.mxu0 0.0
  %1714 = vmatprep.subr.mxu0 0.0
  %1715 = vmatpush1.msra.mxu0 0.0
  %1716 = vmatprep.subr.mxu0 0.0
  %1717 = vmatpush1.msra.mxu0 0.0
  %1718 = vmatprep.subr.mxu0 0.0
  %1719 = vmatpush1.msra.mxu0 0.0
  %1720 = vmatprep.subr.mxu0 0.0
  %1721 = vmatpush1.msra.mxu0 0.0
  %1722 = vmatprep.subr.mxu0 0.0
  %1723 = vmatpush1.msra.mxu0 0.0
  %1724 = vmatprep.subr.mxu0 0.0
  %1725 = vmatpush1.msra.mxu0 0.0
  %1726 = vmatprep.subr.mxu0 0.0
  %1727 = vmatpush1.msra.mxu0 0.0
  %1728 = vmatprep.subr.mxu0 0.0
  %1729 = vmatpush1.msra.mxu0 0.0
  %1730 = vmatprep.subr.mxu0 0.0
  %1731 = vmatpush1.msra.mxu0 0.0
  %1732 = vmatprep.subr.mxu0 0.0
  %1733 = vmatpush1.msra.mxu0 0.0
  %1734 = vmatprep.subr.mxu0 0.0
  %1735 = vmatpush1.msra.mxu0 0.0
  %1736 = vmatprep.subr.mxu0 0.0
  %1737 = vmatpush1.msra.mxu0 0.0
  %1738 = vmatprep.subr.mxu0 0.0
  %1739 = vmatpush1.msra.mxu0 0.0
  %1740 = vmatprep.subr.mxu0 0.0
  %1741 = vmatpush1.msra.mxu0 0.0
  %1742 = vmatprep.subr.mxu0 0.0
  %1743 = vmatpush1.msra.mxu0 0.0
  %1744 = vmatprep.subr.mxu0 0.0
  %1745 = vmatpush1.msra.mxu0 0.0
  %1746 = vmatprep.mubr.f32.mxu0 0.0
  %1747 = vmatmul.mubr.f32.gmra.mrb[0].mxu0 %v1680
  %v1748 = vpop.f32.mrb[0].mxu0
  %v1749 = vadd.f32 0.0, %v1748
  %v1750 = vpop.f32.mrb[0].mxu0
  %1751 = vdwg.mxu0
  %v1753 = vsel %vm419, %v1654, 0
  %1755 = vmatprep.subr.mxu0 0.0
  %1756 = vmatpush1.msra.mxu0 %v1655
  %1757 = vmatprep.subr.mxu0 0.0
  %1758 = vmatpush1.msra.mxu0 %v1656
  %1759 = vmatprep.subr.mxu0 0.0
  %1760 = vmatpush1.msra.mxu0 %v1657
  %1761 = vmatprep.subr.mxu0 0.0
  %1762 = vmatpush1.msra.mxu0 %v1658
  %1763 = vmatprep.subr.mxu0 0.0
  %1764 = vmatpush1.msra.mxu0 %v1659
  %1765 = vmatprep.subr.mxu0 0.0
  %1766 = vmatpush1.msra.mxu0 %v1660
  %1767 = vmatprep.subr.mxu0 0.0
  %1768 = vmatpush1.msra.mxu0 %v1661
  %1769 = vmatprep.subr.mxu0 0.0
  %1770 = vmatpush1.msra.mxu0 %v1662
  %1771 = vmatprep.subr.mxu0 0.0
  %1772 = vmatpush1.msra.mxu0 0.0
  %1773 = vmatprep.subr.mxu0 0.0
  %1774 = vmatpush1.msra.mxu0 0.0
  %1775 = vmatprep.subr.mxu0 0.0
  %1776 = vmatpush1.msra.mxu0 0.0
  %1777 = vmatprep.subr.mxu0 0.0
  %1778 = vmatpush1.msra.mxu0 0.0
  %1779 = vmatprep.subr.mxu0 0.0
  %1780 = vmatpush1.msra.mxu0 0.0
  %1781 = vmatprep.subr.mxu0 0.0
  %1782 = vmatpush1.msra.mxu0 0.0
  %1783 = vmatprep.subr.mxu0 0.0
  %1784 = vmatpush1.msra.mxu0 0.0
  %1785 = vmatprep.subr.mxu0 0.0
  %1786 = vmatpush1.msra.mxu0 0.0
  %1787 = vmatprep.subr.mxu0 0.0
  %1788 = vmatpush1.msra.mxu0 0.0
  %1789 = vmatprep.subr.mxu0 0.0
  %1790 = vmatpush1.msra.mxu0 0.0
  %1791 = vmatprep.subr.mxu0 0.0
  %1792 = vmatpush1.msra.mxu0 0.0
  %1793 = vmatprep.subr.mxu0 0.0
  %1794 = vmatpush1.msra.mxu0 0.0
  %1795 = vmatprep.subr.mxu0 0.0
  %1796 = vmatpush1.msra.mxu0 0.0
  %1797 = vmatprep.subr.mxu0 0.0
  %1798 = vmatpush1.msra.mxu0 0.0
  %1799 = vmatprep.subr.mxu0 0.0
  %1800 = vmatpush1.msra.mxu0 0.0
  %1801 = vmatprep.subr.mxu0 0.0
  %1802 = vmatpush1.msra.mxu0 0.0
  %1803 = vmatprep.subr.mxu0 0.0
  %1804 = vmatpush1.msra.mxu0 0.0
  %1805 = vmatprep.subr.mxu0 0.0
  %1806 = vmatpush1.msra.mxu0 0.0
  %1807 = vmatprep.subr.mxu0 0.0
  %1808 = vmatpush1.msra.mxu0 0.0
  %1809 = vmatprep.subr.mxu0 0.0
  %1810 = vmatpush1.msra.mxu0 0.0
  %1811 = vmatprep.subr.mxu0 0.0
  %1812 = vmatpush1.msra.mxu0 0.0
  %1813 = vmatprep.subr.mxu0 0.0
  %1814 = vmatpush1.msra.mxu0 0.0
  %1815 = vmatprep.subr.mxu0 0.0
  %1816 = vmatpush1.msra.mxu0 0.0
  %1817 = vmatprep.subr.mxu0 0.0
  %1818 = vmatpush1.msra.mxu0 0.0
  %1819 = vmatprep.mubr.f32.mxu0 0.0
  %1820 = vmatmul.mubr.f32.gmra.mrb[0].mxu0 %v1753
  %v1821 = vpop.f32.mrb[0].mxu0
  %v1822 = vadd.f32 %v1749, %v1821
  %v1823 = vpop.f32.mrb[0].mxu0
  %1824 = vdwg.mxu0
  %v1825 = vld [vmem:[%s231] ss:$2 sm:$0x1]
  %v1826 = vld [vmem:[%s1146] ss:$2 sm:$0x1]
  %v1828 = vrot.slane %v1826, 7
  %v1830 = vsel %vm440, %v1825, %v1828
  %s1831 = scalar_lea.vmem %s4, 128
  %v1832 = vld [vmem:[%s1831] sm:$0xff]
  %v1833 = vld [vmem:[%s1831 + $0x8] sm:$0xff]
  %v1834 = vld [vmem:[%s1831 + $0x10] sm:$0xff]
  %v1835 = vld [vmem:[%s1831 + $0x18] sm:$0xff]
  %v1836 = vld [vmem:[%s1831 + $0x20] sm:$0xff]
  %v1837 = vld [vmem:[%s1831 + $0x28] sm:$0xff]
  %v1838 = vld [vmem:[%s1831 + $0x30] sm:$0xff]
  %v1839 = vld [vmem:[%s1831 + $0x38] sm:$0xff]
  %v1841 = vsel %vm419, %v1830, 0
  %1843 = vmatprep.subr.mxu0 0.0
  %1844 = vmatpush1.msra.mxu0 %v1832
  %1845 = vmatprep.subr.mxu0 0.0
  %1846 = vmatpush1.msra.mxu0 %v1833
  %1847 = vmatprep.subr.mxu0 0.0
  %1848 = vmatpush1.msra.mxu0 %v1834
  %1849 = vmatprep.subr.mxu0 0.0
  %1850 = vmatpush1.msra.mxu0 %v1835
  %1851 = vmatprep.subr.mxu0 0.0
  %1852 = vmatpush1.msra.mxu0 %v1836
  %1853 = vmatprep.subr.mxu0 0.0
  %1854 = vmatpush1.msra.mxu0 %v1837
  %1855 = vmatprep.subr.mxu0 0.0
  %1856 = vmatpush1.msra.mxu0 %v1838
  %1857 = vmatprep.subr.mxu0 0.0
  %1858 = vmatpush1.msra.mxu0 %v1839
  %1859 = vmatprep.subr.mxu0 0.0
  %1860 = vmatpush1.msra.mxu0 0.0
  %1861 = vmatprep.subr.mxu0 0.0
  %1862 = vmatpush1.msra.mxu0 0.0
  %1863 = vmatprep.subr.mxu0 0.0
  %1864 = vmatpush1.msra.mxu0 0.0
  %1865 = vmatprep.subr.mxu0 0.0
  %1866 = vmatpush1.msra.mxu0 0.0
  %1867 = vmatprep.subr.mxu0 0.0
  %1868 = vmatpush1.msra.mxu0 0.0
  %1869 = vmatprep.subr.mxu0 0.0
  %1870 = vmatpush1.msra.mxu0 0.0
  %1871 = vmatprep.subr.mxu0 0.0
  %1872 = vmatpush1.msra.mxu0 0.0
  %1873 = vmatprep.subr.mxu0 0.0
  %1874 = vmatpush1.msra.mxu0 0.0
  %1875 = vmatprep.subr.mxu0 0.0
  %1876 = vmatpush1.msra.mxu0 0.0
  %1877 = vmatprep.subr.mxu0 0.0
  %1878 = vmatpush1.msra.mxu0 0.0
  %1879 = vmatprep.subr.mxu0 0.0
  %1880 = vmatpush1.msra.mxu0 0.0
  %1881 = vmatprep.subr.mxu0 0.0
  %1882 = vmatpush1.msra.mxu0 0.0
  %1883 = vmatprep.subr.mxu0 0.0
  %1884 = vmatpush1.msra.mxu0 0.0
  %1885 = vmatprep.subr.mxu0 0.0
  %1886 = vmatpush1.msra.mxu0 0.0
  %1887 = vmatprep.subr.mxu0 0.0
  %1888 = vmatpush1.msra.mxu0 0.0
  %1889 = vmatprep.subr.mxu0 0.0
  %1890 = vmatpush1.msra.mxu0 0.0
  %1891 = vmatprep.subr.mxu0 0.0
  %1892 = vmatpush1.msra.mxu0 0.0
  %1893 = vmatprep.subr.mxu0 0.0
  %1894 = vmatpush1.msra.mxu0 0.0
  %1895 = vmatprep.subr.mxu0 0.0
  %1896 = vmatpush1.msra.mxu0 0.0
  %1897 = vmatprep.subr.mxu0 0.0
  %1898 = vmatpush1.msra.mxu0 0.0
  %1899 = vmatprep.subr.mxu0 0.0
  %1900 = vmatpush1.msra.mxu0 0.0
  %1901 = vmatprep.subr.mxu0 0.0
  %1902 = vmatpush1.msra.mxu0 0.0
  %1903 = vmatprep.subr.mxu0 0.0
  %1904 = vmatpush1.msra.mxu0 0.0
  %1905 = vmatprep.subr.mxu0 0.0
  %1906 = vmatpush1.msra.mxu0 0.0
  %1907 = vmatprep.mubr.f32.mxu0 0.0
  %1908 = vmatmul.mubr.f32.gmra.mrb[0].mxu0 %v1841
  %v1909 = vpop.f32.mrb[0].mxu0
  %v1910 = vadd.f32 0.0, %v1909
  %v1911 = vpop.f32.mrb[0].mxu0
  %1912 = vdwg.mxu0
  %v1913 = vadd.f32 %v1822, %v1910
  %v1914 = vld [vmem:[%s325] ss:$2 sm:$0x1]
  %v1915 = vld [vmem:[%s1162] ss:$2 sm:$0x1]
  %v1917 = vrot.slane %v1915, 7
  %v1919 = vsel %vm440, %v1914, %v1917
  %s1920 = scalar_lea.vmem %s4, 192
  %v1921 = vld [vmem:[%s1920] sm:$0xff]
  %v1922 = vld [vmem:[%s1920 + $0x8] sm:$0xff]
  %v1923 = vld [vmem:[%s1920 + $0x10] sm:$0xff]
  %v1924 = vld [vmem:[%s1920 + $0x18] sm:$0xff]
  %v1925 = vld [vmem:[%s1920 + $0x20] sm:$0xff]
  %v1926 = vld [vmem:[%s1920 + $0x28] sm:$0xff]
  %v1927 = vld [vmem:[%s1920 + $0x30] sm:$0xff]
  %v1928 = vld [vmem:[%s1920 + $0x38] sm:$0xff]
  %v1930 = vsel %vm419, %v1919, 0
  %1932 = vmatprep.subr.mxu0 0.0
  %1933 = vmatpush1.msra.mxu0 %v1921
  %1934 = vmatprep.subr.mxu0 0.0
  %1935 = vmatpush1.msra.mxu0 %v1922
  %1936 = vmatprep.subr.mxu0 0.0
  %1937 = vmatpush1.msra.mxu0 %v1923
  %1938 = vmatprep.subr.mxu0 0.0
  %1939 = vmatpush1.msra.mxu0 %v1924
  %1940 = vmatprep.subr.mxu0 0.0
  %1941 = vmatpush1.msra.mxu0 %v1925
  %1942 = vmatprep.subr.mxu0 0.0
  %1943 = vmatpush1.msra.mxu0 %v1926
  %1944 = vmatprep.subr.mxu0 0.0
  %1945 = vmatpush1.msra.mxu0 %v1927
  %1946 = vmatprep.subr.mxu0 0.0
  %1947 = vmatpush1.msra.mxu0 %v1928
  %1948 = vmatprep.subr.mxu0 0.0
  %1949 = vmatpush1.msra.mxu0 0.0
  %1950 = vmatprep.subr.mxu0 0.0
  %1951 = vmatpush1.msra.mxu0 0.0
  %1952 = vmatprep.subr.mxu0 0.0
  %1953 = vmatpush1.msra.mxu0 0.0
  %1954 = vmatprep.subr.mxu0 0.0
  %1955 = vmatpush1.msra.mxu0 0.0
  %1956 = vmatprep.subr.mxu0 0.0
  %1957 = vmatpush1.msra.mxu0 0.0
  %1958 = vmatprep.subr.mxu0 0.0
  %1959 = vmatpush1.msra.mxu0 0.0
  %1960 = vmatprep.subr.mxu0 0.0
  %1961 = vmatpush1.msra.mxu0 0.0
  %1962 = vmatprep.subr.mxu0 0.0
  %1963 = vmatpush1.msra.mxu0 0.0
  %1964 = vmatprep.subr.mxu0 0.0
  %1965 = vmatpush1.msra.mxu0 0.0
  %1966 = vmatprep.subr.mxu0 0.0
  %1967 = vmatpush1.msra.mxu0 0.0
  %1968 = vmatprep.subr.mxu0 0.0
  %1969 = vmatpush1.msra.mxu0 0.0
  %1970 = vmatprep.subr.mxu0 0.0
  %1971 = vmatpush1.msra.mxu0 0.0
  %1972 = vmatprep.subr.mxu0 0.0
  %1973 = vmatpush1.msra.mxu0 0.0
  %1974 = vmatprep.subr.mxu0 0.0
  %1975 = vmatpush1.msra.mxu0 0.0
  %1976 = vmatprep.subr.mxu0 0.0
  %1977 = vmatpush1.msra.mxu0 0.0
  %1978 = vmatprep.subr.mxu0 0.0
  %1979 = vmatpush1.msra.mxu0 0.0
  %1980 = vmatprep.subr.mxu0 0.0
  %1981 = vmatpush1.msra.mxu0 0.0
  %1982 = vmatprep.subr.mxu0 0.0
  %1983 = vmatpush1.msra.mxu0 0.0
  %1984 = vmatprep.subr.mxu0 0.0
  %1985 = vmatpush1.msra.mxu0 0.0
  %1986 = vmatprep.subr.mxu0 0.0
  %1987 = vmatpush1.msra.mxu0 0.0
  %1988 = vmatprep.subr.mxu0 0.0
  %1989 = vmatpush1.msra.mxu0 0.0
  %1990 = vmatprep.subr.mxu0 0.0
  %1991 = vmatpush1.msra.mxu0 0.0
  %1992 = vmatprep.subr.mxu0 0.0
  %1993 = vmatpush1.msra.mxu0 0.0
  %1994 = vmatprep.subr.mxu0 0.0
  %1995 = vmatpush1.msra.mxu0 0.0
  %1996 = vmatprep.mubr.f32.mxu0 0.0
  %1997 = vmatmul.mubr.f32.gmra.mrb[0].mxu0 %v1930
  %v1998 = vpop.f32.mrb[0].mxu0
  %v1999 = vadd.f32 0.0, %v1998
  %v2000 = vpop.f32.mrb[0].mxu0
  %2001 = vdwg.mxu0
  %v2002 = vadd.f32 %v1913, %v1999
  %v2003 = vsel %vm1644, %v2002, 0.0
  %v2004 = vrot.slane %v2003, 4
  %v2005 = vadd.f32 %v2003, %v2004
  %v2006 = vrot.slane %v2005, 2
  %v2007 = vadd.f32 %v2005, %v2006
  %v2008 = vrot.slane %v2007, 1
  %v2009 = vadd.f32 %v2007, %v2008
  %v2010 = vmul.f32 %v2002, %v2002
  %v2011 = vsel %vm1644, %v2010, 0.0
  %v2012 = vrot.slane %v2011, 4
  %v2013 = vadd.f32 %v2011, %v2012
  %v2014 = vrot.slane %v2013, 2
  %v2015 = vadd.f32 %v2013, %v2014
  %v2016 = vrot.slane %v2015, 1
  %v2017 = vadd.f32 %v2015, %v2016
  %v2018 = vsel %vm440, %v2009, %v2017
  %s2019 = scalar_lea.vmem %s6, 192
  %v2020 = vld [vmem:[%s2019] sm:$0xff]
  %v2021 = vld [vmem:[%s2019 + $0x8] sm:$0xff]
  %v2022 = vld [vmem:[%s2019 + $0x10] sm:$0xff]
  %v2023 = vld [vmem:[%s2019 + $0x18] sm:$0xff]
  %v2024 = vld [vmem:[%s2019 + $0x20] sm:$0xff]
  %v2025 = vld [vmem:[%s2019 + $0x28] sm:$0xff]
  %v2026 = vld [vmem:[%s2019 + $0x30] sm:$0xff]
  %v2027 = vld [vmem:[%s2019 + $0x38] sm:$0xff]
  %v2029 = vsel %vm419, %v2018, 0
  %2031 = vmatprep.subr.mxu0 0.0
  %2032 = vmatpush1.msra.mxu0 %v2020
  %2033 = vmatprep.subr.mxu0 0.0
  %2034 = vmatpush1.msra.mxu0 %v2021
  %2035 = vmatprep.subr.mxu0 0.0
  %2036 = vmatpush1.msra.mxu0 %v2022
  %2037 = vmatprep.subr.mxu0 0.0
  %2038 = vmatpush1.msra.mxu0 %v2023
  %2039 = vmatprep.subr.mxu0 0.0
  %2040 = vmatpush1.msra.mxu0 %v2024
  %2041 = vmatprep.subr.mxu0 0.0
  %2042 = vmatpush1.msra.mxu0 %v2025
  %2043 = vmatprep.subr.mxu0 0.0
  %2044 = vmatpush1.msra.mxu0 %v2026
  %2045 = vmatprep.subr.mxu0 0.0
  %2046 = vmatpush1.msra.mxu0 %v2027
  %2047 = vmatprep.subr.mxu0 0.0
  %2048 = vmatpush1.msra.mxu0 0.0
  %2049 = vmatprep.subr.mxu0 0.0
  %2050 = vmatpush1.msra.mxu0 0.0
  %2051 = vmatprep.subr.mxu0 0.0
  %2052 = vmatpush1.msra.mxu0 0.0
  %2053 = vmatprep.subr.mxu0 0.0
  %2054 = vmatpush1.msra.mxu0 0.0
  %2055 = vmatprep.subr.mxu0 0.0
  %2056 = vmatpush1.msra.mxu0 0.0
  %2057 = vmatprep.subr.mxu0 0.0
  %2058 = vmatpush1.msra.mxu0 0.0
  %2059 = vmatprep.subr.mxu0 0.0
  %2060 = vmatpush1.msra.mxu0 0.0
  %2061 = vmatprep.subr.mxu0 0.0
  %2062 = vmatpush1.msra.mxu0 0.0
  %2063 = vmatprep.subr.mxu0 0.0
  %2064 = vmatpush1.msra.mxu0 0.0
  %2065 = vmatprep.subr.mxu0 0.0
  %2066 = vmatpush1.msra.mxu0 0.0
  %2067 = vmatprep.subr.mxu0 0.0
  %2068 = vmatpush1.msra.mxu0 0.0
  %2069 = vmatprep.subr.mxu0 0.0
  %2070 = vmatpush1.msra.mxu0 0.0
  %2071 = vmatprep.subr.mxu0 0.0
  %2072 = vmatpush1.msra.mxu0 0.0
  %2073 = vmatprep.subr.mxu0 0.0
  %2074 = vmatpush1.msra.mxu0 0.0
  %2075 = vmatprep.subr.mxu0 0.0
  %2076 = vmatpush1.msra.mxu0 0.0
  %2077 = vmatprep.subr.mxu0 0.0
  %2078 = vmatpush1.msra.mxu0 0.0
  %2079 = vmatprep.subr.mxu0 0.0
  %2080 = vmatpush1.msra.mxu0 0.0
  %2081 = vmatprep.subr.mxu0 0.0
  %2082 = vmatpush1.msra.mxu0 0.0
  %2083 = vmatprep.subr.mxu0 0.0
  %2084 = vmatpush1.msra.mxu0 0.0
  %2085 = vmatprep.subr.mxu0 0.0
  %2086 = vmatpush1.msra.mxu0 0.0
  %2087 = vmatprep.subr.mxu0 0.0
  %2088 = vmatpush1.msra.mxu0 0.0
  %2089 = vmatprep.subr.mxu0 0.0
  %2090 = vmatpush1.msra.mxu0 0.0
  %2091 = vmatprep.subr.mxu0 0.0
  %2092 = vmatpush1.msra.mxu0 0.0
  %2093 = vmatprep.subr.mxu0 0.0
  %2094 = vmatpush1.msra.mxu0 0.0
  %2095 = vmatprep.mubr.f32.mxu0 0.0
  %2096 = vmatmul.mubr.f32.gmra.mrb[0].mxu0 %v2029
  %v2097 = vpop.f32.mrb[0].mxu0
  %v2098 = vadd.f32 0.0, %v2097
  %v2099 = vpop.f32.mrb[0].mxu0
  %2100 = vdwg.mxu0
  %v2101 = vmul.f32 %v2098, 0.5
  %v2102 = vmul.f32 %v2101, %v2101
  %v2104 = vrot.slane %v2102, 7
  %v2106 = vsub.f32 %v2101, %v2104
  %v2107 = vld [vmem:[%s5 + $0x6] sm:$0x1]
  %v2108 = vld [vmem:[%s5 + $0x7] sm:$0x1]
  %v2109 = vadd.f32 %v2106, 1e-05
  %v2110 = vrsqrt.pop %v2109
  %v2112 = vrot.slane %v2110, 1
  %v2114 = vmul.f32 %v2107, %v2112
  %v2115 = vmul.f32 %v2101, %v2114
  %v2116 = vsub.f32 %v2108, %v2115
  %v2117 = vlaneseq
  %v2118 = vshrl.u32 %v2117, 7
  %v2119 = vsub.s32 0, %v2118
  %v2120 = vrot.slane %v2114, %v2119
  %v2121 = vmul.f32 %v2002, %v2120
  %v2122 = vlaneseq
  %v2123 = vshrl.u32 %v2122, 7
  %v2124 = vsub.s32 0, %v2123
  %v2125 = vrot.slane %v2116, %v2124
  %v2126 = vadd.f32 %v2121, %v2125
  %v2127 = vmul.f32 %v2126, 0.2
  %v2128 = vmax.f32 %v2126, %v2127
  %v2129 = vld [vmem:[%s7] sm:$0xff]
  %v2130 = vld [vmem:[%s7 + $0x8] sm:$0xff]
  %v2131 = vld [vmem:[%s7 + $0x10] sm:$0xff]
  %v2132 = vld [vmem:[%s7 + $0x18] sm:$0xff]
  %v2133 = vld [vmem:[%s7 + $0x20] sm:$0xff]
  %v2134 = vld [vmem:[%s7 + $0x28] sm:$0xff]
  %v2135 = vld [vmem:[%s7 + $0x30] sm:$0xff]
  %v2136 = vld [vmem:[%s7 + $0x38] sm:$0xff]
  %v2137 = vld [vmem:[%s8] sm:$0x1]
  %v2139 = vlaneseq
  %v2140 = vshrl.u32 %v2139, 7
  %v2141 = vsub.s32 0, %v2140
  %v2142 = vrot.slane %v2137, %v2141
  %v2145 = vsel %vm419, %v2128, 0
  %2147 = vmatprep.subr.mxu0 0.0
  %2148 = vmatpush1.msra.mxu0 %v2129
  %2149 = vmatprep.subr.mxu0 0.0
  %2150 = vmatpush1.msra.mxu0 %v2130
  %2151 = vmatprep.subr.mxu0 0.0
  %2152 = vmatpush1.msra.mxu0 %v2131
  %2153 = vmatprep.subr.mxu0 0.0
  %2154 = vmatpush1.msra.mxu0 %v2132
  %2155 = vmatprep.subr.mxu0 0.0
  %2156 = vmatpush1.msra.mxu0 %v2133
  %2157 = vmatprep.subr.mxu0 0.0
  %2158 = vmatpush1.msra.mxu0 %v2134
  %2159 = vmatprep.subr.mxu0 0.0
  %2160 = vmatpush1.msra.mxu0 %v2135
  %2161 = vmatprep.subr.mxu0 0.0
  %2162 = vmatpush1.msra.mxu0 %v2136
  %2163 = vmatprep.subr.mxu0 0.0
  %2164 = vmatpush1.msra.mxu0 0.0
  %2165 = vmatprep.subr.mxu0 0.0
  %2166 = vmatpush1.msra.mxu0 0.0
  %2167 = vmatprep.subr.mxu0 0.0
  %2168 = vmatpush1.msra.mxu0 0.0
  %2169 = vmatprep.subr.mxu0 0.0
  %2170 = vmatpush1.msra.mxu0 0.0
  %2171 = vmatprep.subr.mxu0 0.0
  %2172 = vmatpush1.msra.mxu0 0.0
  %2173 = vmatprep.subr.mxu0 0.0
  %2174 = vmatpush1.msra.mxu0 0.0
  %2175 = vmatprep.subr.mxu0 0.0
  %2176 = vmatpush1.msra.mxu0 0.0
  %2177 = vmatprep.subr.mxu0 0.0
  %2178 = vmatpush1.msra.mxu0 0.0
  %2179 = vmatprep.subr.mxu0 0.0
  %2180 = vmatpush1.msra.mxu0 0.0
  %2181 = vmatprep.subr.mxu0 0.0
  %2182 = vmatpush1.msra.mxu0 0.0
  %2183 = vmatprep.subr.mxu0 0.0
  %2184 = vmatpush1.msra.mxu0 0.0
  %2185 = vmatprep.subr.mxu0 0.0
  %2186 = vmatpush1.msra.mxu0 0.0
  %2187 = vmatprep.subr.mxu0 0.0
  %2188 = vmatpush1.msra.mxu0 0.0
  %2189 = vmatprep.subr.mxu0 0.0
  %2190 = vmatpush1.msra.mxu0 0.0
  %2191 = vmatprep.subr.mxu0 0.0
  %2192 = vmatpush1.msra.mxu0 0.0
  %2193 = vmatprep.subr.mxu0 0.0
  %2194 = vmatpush1.msra.mxu0 0.0
  %2195 = vmatprep.subr.mxu0 0.0
  %2196 = vmatpush1.msra.mxu0 0.0
  %2197 = vmatprep.subr.mxu0 0.0
  %2198 = vmatpush1.msra.mxu0 0.0
  %2199 = vmatprep.subr.mxu0 0.0
  %2200 = vmatpush1.msra.mxu0 0.0
  %2201 = vmatprep.subr.mxu0 0.0
  %2202 = vmatpush1.msra.mxu0 0.0
  %2203 = vmatprep.subr.mxu0 0.0
  %2204 = vmatpush1.msra.mxu0 0.0
  %2205 = vmatprep.subr.mxu0 0.0
  %2206 = vmatpush1.msra.mxu0 0.0
  %2207 = vmatprep.subr.mxu0 0.0
  %2208 = vmatpush1.msra.mxu0 0.0
  %2209 = vmatprep.subr.mxu0 0.0
  %2210 = vmatpush1.msra.mxu0 0.0
  %2211 = vmatprep.mubr.f32.mxu0 0.0
  %2212 = vmatmul.mubr.f32.gmra.mrb[0].mxu0 %v2145
  %v2213 = vpop.f32.mrb[0].mxu0
  %v2214 = vadd.f32 %v2142, %v2213
  %v2215 = vpop.f32.mrb[0].mxu0
  %2216 = vdwg.mxu0
  %v2217 = vld [vmem:[%s9] sm:$0x3]
  %v2218 = vmul.f32 %v2214, 0.5
  %v2219 = vmul.f32 %v2218, 1.442695
  %v2220 = vpow.pop %v2219
  %2222 = vrot.lane.b32.xlu0 %v2220, 120
  %v2223 = vpop.permute.xlu0 %2222
  %v2225 = vmul.f32 %v2217, %v2223
  %v2226 = vadd.f32 %v2214, %v2225
  %2228 = vrot.lane.b32.xlu0 %v2214, 8
  %v2229 = vpop.permute.xlu0 %2228
  %v2231 = vsel %vm561, %v2226, %v2229
  %v2232 = vsel %vm563, %v2231, %v2229
  %vm2233 = vcmask 189440
  %2234 = vst.msk [vmem:[%s10] sm:$0x3] %vm2233, %v2232
  // Predicated region
  $region42: #{encoder_forward.1} parent=0 // pred_check
    _
  $region43: #{encoder_forward.1} parent=0 // pred_check_branch
    %2236 = sbr.rel (0) target = $region45
  $region44: #{encoder_forward.1} parent=0 // pred_region
    _
  $region45: #{encoder_forward.1} parent=0 // pred_fallthru
    _
  // Predicated region
  $region46: #{encoder_forward.1} parent=0 // pred_check
    _
  $region47: #{encoder_forward.1} parent=0 // pred_check_branch
    %2238 = sbr.rel (0) target = $region49
  $region48: #{encoder_forward.1} parent=0 // pred_region
    _
  $region49: #{encoder_forward.1} parent=0 // pred_fallthru
    _

</llo_original>
